<compile_context>
chip_gen: v5e
topology: v5e:2x2
jax: 0.10.0
libtpu: 0.0.40
codegen_flags: <defaults>
</compile_context>

<pallas_src>
import math
import functools

import jax
import jax.numpy as jnp
from jax import lax
from jax.experimental import pallas as pl
from jax.experimental.pallas import tpu as pltpu


# ----------------------------- config -----------------------------
class Config:
    padded_vocab_size = 128
    n_embd = 32
    n_head = 2
    head_size = 16            # n_embd // n_head
    n_query_groups = 2        # == n_head -> plain MHA
    n_layer = 2
    block_size = 16
    rotary_percentage = 1.0
    intermediate_size = 64
    norm_eps = 1e-5
    condense_ratio = 1
    bias = False


CFG = Config()


# ----------------------------- RoPE cache (glue) -----------------------------
def build_rope_cache_jax(seq_len, n_elem, base=10000, condense_ratio=1):
    theta = 1.0 / (base ** (jnp.arange(0, n_elem, 2, dtype=jnp.float32) / n_elem))
    seq_idx = jnp.arange(seq_len, dtype=jnp.float32) / condense_ratio
    idx_theta = jnp.outer(seq_idx, theta)
    # GPT.build_rope_cache requests bf16 (values are bf16-rounded like the reference).
    return (jnp.cos(idx_theta).astype(jnp.bfloat16),
            jnp.sin(idx_theta).astype(jnp.bfloat16))


# ----------------------------- fused transformer-stack kernel -----------------------------
def _stack_kernel(x_ref, cos_ref, sin_ref, n1w_ref, n2w_ref,
                  wqkv_ref, wqkvr_ref, wproj_ref, wgu_ref, wdn_ref,
                  out_ref, *, B, T, n_head, q_per_kv, hs, inter, eps):
    layer = pl.program_id(0)

    # Layer 0: load the embeddings into the resident output block (= residual carry).
    @pl.when(layer == 0)
    def _():
        out_ref[...] = x_ref[...]

    x = out_ref[...]                               # (B*T, C) f32 residual stream
    n_kv = n_head // q_per_kv
    hq = n_head * hs                               # width of the Q column block
    hk = n_kv * hs                                 # width of the K column block

    # Causal mask built once per grid step (shared across batch & heads).
    row = lax.broadcasted_iota(jnp.int32, (T, T), 0)
    col = lax.broadcasted_iota(jnp.int32, (T, T), 1)
    causal = col <= row

    # ---- attention sub-block: RMSNorm -> fused QKV (+RoPE-in-weights) -> SDPA -> proj
    n1 = x * lax.rsqrt(jnp.mean(x * x, axis=-1, keepdims=True) + eps)
    n1 = (n1 * n1w_ref[0]).astype(jnp.bfloat16)    # bf16 MXU operand

    # Two wide, lane-dense matmuls instead of 5 dots per head.
    qkv = jnp.dot(n1, wqkv_ref[0], preferred_element_type=jnp.float32)    # (B*T, QKVO)
    qkvr = jnp.dot(n1, wqkvr_ref[0], preferred_element_type=jnp.float32)  # rotate_half companion
    # One elementwise RoPE over the whole fused tensor.  Q columns of cos/sin carry
    # the 1/sqrt(hs) scale; V columns use cos=1, sin=0 (and zero rotated-weight cols).
    roped = qkv * cos_ref[...] + qkvr * sin_ref[...]

    # Per-(batch, head) softmax-attention; outputs are concatenated so the output
    # projection is ONE (B*T, H*hs) @ (H*hs, C) dot.
    # TODO(synk): switch to a flash-style fori_loop body for large B*H.
    batch_outs = []
    for b in range(B):
        r0 = b * T
        heads = []
        for h in range(n_head):
            g = h // q_per_kv                      # GQA group of query head h
            q = roped[r0:r0 + T, h * hs:(h + 1) * hs].astype(jnp.bfloat16)
            k = roped[r0:r0 + T, hq + g * hs:hq + (g + 1) * hs].astype(jnp.bfloat16)
            v = roped[r0:r0 + T, hq + hk + g * hs:hq + hk + (g + 1) * hs].astype(jnp.bfloat16)
            s = lax.dot_general(q, k, (((1,), (1,)), ((), ())),
                                preferred_element_type=jnp.float32)       # (T, T)
            s = jnp.where(causal, s, -jnp.inf)
            m = jnp.max(s, axis=-1, keepdims=True)
            p = jnp.exp(s - m)
            denom = jnp.sum(p, axis=-1, keepdims=True)
            o = jnp.dot(p.astype(jnp.bfloat16), v, preferred_element_type=jnp.float32)
            # approx reciprocal runs on the EUP slot; swap to approx=False for bit parity.
            heads.append(o * pl.reciprocal(denom, approx=True))
        batch_outs.append(jnp.concatenate(heads, axis=-1))                # (T, H*hs)
    y = jnp.concatenate(batch_outs, axis=0).astype(jnp.bfloat16)          # (B*T, H*hs)

    x = x + jnp.dot(y, wproj_ref[0], preferred_element_type=jnp.float32)

    # ---- MLP sub-block: RMSNorm -> SwiGLU (fused gate/up) -> down -> +res
    n2 = x * lax.rsqrt(jnp.mean(x * x, axis=-1, keepdims=True) + eps)
    n2 = (n2 * n2w_ref[0]).astype(jnp.bfloat16)
    gu = jnp.dot(n2, wgu_ref[0], preferred_element_type=jnp.float32)      # (B*T, 2*I)
    gate = gu[:, :inter]
    up = gu[:, inter:]
    hh = (gate * jax.nn.sigmoid(gate) * up).astype(jnp.bfloat16)
    x = x + jnp.dot(hh, wdn_ref[0], preferred_element_type=jnp.float32)

    out_ref[...] = x                               # resident carry; single HBM writeback


def transformer_stack(x2, cos_big, sin_big, prep, *, B, T, eps):
    """x2: (B*T, C) f32 residual stream -> (B*T, C) after all layers."""
    BT, C = x2.shape
    L, _, QKVO = prep["wqkv"].shape
    HHS = prep["wproj"].shape[1]
    TWO_I = prep["w_gate_up"].shape[2]
    I = TWO_I // 2

    kernel = functools.partial(
        _stack_kernel, B=B, T=T, n_head=CFG.n_head,
        q_per_kv=CFG.n_head // CFG.n_query_groups, hs=CFG.head_size,
        inter=I, eps=eps)

    resident = lambda l: (0, 0)      # activations / rope tables: fetched once, resident
    per_layer = lambda l: (l, 0, 0)  # weights: streamed once per layer (not per batch)

    return pl.pallas_call(
        kernel,
        out_shape=jax.ShapeDtypeStruct((BT, C), jnp.float32),
        grid_spec=pltpu.PrefetchScalarGridSpec(
            num_scalar_prefetch=0,
            grid=(L,),
            in_specs=[
                pl.BlockSpec((BT, C), resident),          # embeddings (read at layer 0)
                pl.BlockSpec((BT, QKVO), resident),       # cos (scale folded into Q cols)
                pl.BlockSpec((BT, QKVO), resident),       # sin
                pl.BlockSpec((1, 1, C), per_layer),       # norm_1 weight
                pl.BlockSpec((1, 1, C), per_layer),       # norm_2 weight
                pl.BlockSpec((1, C, QKVO), per_layer),    # fused W_qkv
                pl.BlockSpec((1, C, QKVO), per_layer),    # fused W_qkv rotate_half companion
                pl.BlockSpec((1, HHS, C), per_layer),     # fused W_proj
                pl.BlockSpec((1, C, TWO_I), per_layer),   # fused SwiGLU gate/up
                pl.BlockSpec((1, I, C), per_layer),       # SwiGLU down
            ],
            out_specs=pl.BlockSpec((BT, C), resident),    # residual carry, written back once
        ),
        compiler_params=pltpu.CompilerParams(
            dimension_semantics=("arbitrary",),           # layer axis carries state
            vmem_limit_bytes=64 * 1024 * 1024),
        input_output_aliases={0: 0},                      # residual updated in place
    )(x2, cos_big, sin_big,
      prep["norm1_w"], prep["norm2_w"],
      prep["wqkv"], prep["wqkv_rot"], prep["wproj"],
      prep["w_gate_up"], prep["w_down"])


# ----------------------------- fused ln_f + lm_head kernel -----------------------------
def _head_kernel(x_ref, lnw_ref, w_ref, o_ref, n_scr, *, eps):
    # ln_f computed exactly once, cached in VMEM, reused for every vocab tile.
    @pl.when(pl.program_id(0) == 0)
    def _():
        x = x_ref[...]
        n = x * lax.rsqrt(jnp.mean(x * x, axis=-1, keepdims=True) + eps)
        n_scr[...] = (n * lnw_ref[...]).astype(jnp.bfloat16)
    o_ref[...] = jnp.dot(n_scr[...], w_ref[...],
                         preferred_element_type=jnp.float32).astype(o_ref.dtype)


def lm_head(x2, prep, *, eps, block_v=512):
    BT, C = x2.shape
    V = prep["lm_head_w_t"].shape[1]
    block_v = min(block_v, V)
    assert V % block_v == 0
    # TODO(synk): for large B*T add a row-tile grid axis; at many vocab tiles add
    #             pipeline_mode=pl.Buffered(3) on the weight spec.
    return pl.pallas_call(
        functools.partial(_head_kernel, eps=eps),
        out_shape=jax.ShapeDtypeStruct((BT, V), jnp.float32),
        grid_spec=pltpu.PrefetchScalarGridSpec(
            num_scalar_prefetch=0,
            grid=(V // block_v,),                         # lane-dense vocab tiles
            in_specs=[
                pl.BlockSpec((BT, C), lambda j: (0, 0)),
                pl.BlockSpec((1, C), lambda j: (0, 0)),
                pl.BlockSpec((C, block_v), lambda j: (0, j)),
            ],
            out_specs=pl.BlockSpec((BT, block_v), lambda j: (0, j)),
            scratch_shapes=[pltpu.VMEM((BT, C), jnp.bfloat16)],   # cached ln_f(x)
        ),
        compiler_params=pltpu.CompilerParams(
            dimension_semantics=("arbitrary",),           # scratch init at j==0 must run first
            vmem_limit_bytes=64 * 1024 * 1024),
    )(x2, prep["ln_f_w"], prep["lm_head_w_t"])


# ----------------------------- parameters (host-side weight prep) -----------------------------
def init_params(key):
    C, V, I = CFG.n_embd, CFG.padded_vocab_size, CFG.intermediate_size
    H, G, hs = CFG.n_head, CFG.n_query_groups, CFG.head_size
    q_per_kv = H // G
    total_qkv = q_per_kv + 2
    qkv_out = (H + 2 * G) * hs
    n_elem = int(CFG.rotary_percentage * hs)
    half = n_elem // 2
    scale = 1.0 / math.sqrt(hs)
    std = 0.02
    keys = iter(jax.random.split(key, 2 + 5 * CFG.n_layer))

    def w(shape):
        return std * jax.random.normal(next(keys), shape, dtype=jnp.float32)

    def rot_last(wt):
        # (x @ rot_last(W)) == rotate_half(x @ W) over the first n_elem columns.
        return jnp.concatenate(
            [-wt[..., half:n_elem], wt[..., :half],
             jnp.zeros_like(wt[..., n_elem:])], axis=-1)

    def flat(wh):
        # (n_heads, C, hs) -> (C, n_heads*hs), head-major column order.
        return wh.transpose(1, 0, 2).reshape(C, -1)

    wqkv_l, wqkvr_l, wproj_l, wgu_l, wdn_l, n1_l, n2_l = ([] for _ in range(7))
    for _ in range(CFG.n_layer):
        Wa = w((qkv_out, C))                                # attn.weight (out, in)
        Wa_r = Wa.reshape(G, total_qkv, hs, C)              # PyTorch interleaved layout
        WQ = Wa_r[:, :q_per_kv].reshape(H, hs, C).transpose(0, 2, 1)   # (H, C, hs)
        WK = Wa_r[:, q_per_kv].transpose(0, 2, 1)                      # (G, C, hs)
        WV = Wa_r[:, q_per_kv + 1].transpose(0, 2, 1)                  # (G, C, hs)

        wqkv = jnp.concatenate([flat(WQ), flat(WK), flat(WV)], axis=-1)      # (C, qkv_out)
        wqkv_rot = jnp.concatenate(
            [flat(rot_last(WQ)), flat(rot_last(WK)),
             jnp.zeros((C, G * hs), jnp.float32)], axis=-1)                  # V cols = 0

        Wp = w((C, C))                                      # proj.weight (out, in)
        wproj = Wp.T                                        # (H*hs, C), head-major rows

        W1, W2, W3 = w((I, C)), w((I, C)), w((C, I))        # SwiGLU w1/w2/w3
        wgu = jnp.concatenate([W1.T, W2.T], axis=-1)        # (C, 2I): [gate | up]
        wdn = W3.T                                          # (I, C)

        wqkv_l.append(wqkv); wqkvr_l.append(wqkv_rot)
        wproj_l.append(wproj); wgu_l.append(wgu); wdn_l.append(wdn)
        n1_l.append(jnp.ones((1, C), jnp.float32))
        n2_l.append(jnp.ones((1, C), jnp.float32))

    # RoPE cache (bf16 as in GPT.build_rope_cache), widened to the fused qkv layout.
    # Kept f32 in HBM: it is VMEM-resident and fetched once, so f32 avoids a
    # per-layer upcast for negligible extra DMA bytes.
    cos, sin = build_rope_cache_jax(CFG.block_size, n_elem,
                                    condense_ratio=CFG.condense_ratio)
    cos_f, sin_f = cos.astype(jnp.float32), sin.astype(jnp.float32)
    pad_c = jnp.ones((CFG.block_size, hs - n_elem), jnp.float32)
    pad_s = jnp.zeros((CFG.block_size, hs - n_elem), jnp.float32)
    cos_h = jnp.concatenate([cos_f, cos_f, pad_c], axis=-1)          # (block_size, hs)
    sin_h = jnp.concatenate([sin_f, sin_f, pad_s], axis=-1)
    ones_v = jnp.ones((CFG.block_size, G * hs), jnp.float32)         # V passthrough
    zeros_v = jnp.zeros((CFG.block_size, G * hs), jnp.float32)
    # 1/sqrt(hs) attention scale folded into the Q columns (no in-kernel scale mul).
    cos_wide = jnp.concatenate(
        [jnp.tile(cos_h * scale, (1, H)), jnp.tile(cos_h, (1, G)), ones_v], axis=-1)
    sin_wide = jnp.concatenate(
        [jnp.tile(sin_h * scale, (1, H)), jnp.tile(sin_h, (1, G)), zeros_v], axis=-1)

    bf = lambda lst: jnp.stack(lst).astype(jnp.bfloat16)             # bf16 MXU weights

    return {
        "wte": w((V, C)),                                            # embedding (f32 gather)
        "ln_f_w": jnp.ones((1, C), jnp.float32),
        "lm_head_w_t": w((V, C)).T.astype(jnp.bfloat16),             # (C, V) bf16
        "cos_wide": cos_wide, "sin_wide": sin_wide,                  # (block_size, qkv_out)
        "norm1_w": jnp.stack(n1_l), "norm2_w": jnp.stack(n2_l),      # (L, 1, C) f32
        "wqkv": bf(wqkv_l), "wqkv_rot": bf(wqkvr_l),                 # (L, C, qkv_out)
        "wproj": bf(wproj_l),                                        # (L, H*hs, C)
        "w_gate_up": bf(wgu_l),                                      # (L, C, 2I)
        "w_down": bf(wdn_l),                                         # (L, I, C)
    }


# ----------------------------- forward -----------------------------
def gpt_forward(idx, prep):
    B, T = idx.shape
    C = CFG.n_embd
    x = prep["wte"][idx].reshape(B * T, C)                    # embedding gather (plain XLA)
    cos_big = jnp.tile(prep["cos_wide"][:T], (B, 1))          # (B*T, qkv_out)
    sin_big = jnp.tile(prep["sin_wide"][:T], (B, 1))
    x = transformer_stack(x, cos_big, sin_big, prep, B=B, T=T, eps=CFG.norm_eps)
    logits = lm_head(x, prep, eps=CFG.norm_eps)               # 1 pallas_call, ln_f + head
    return logits.reshape(B, T, -1)


# ----------------------------- main -----------------------------
if __name__ == "__main__":
    root = jax.random.PRNGKey(0)
    k_params, k_idx = jax.random.split(root)
    prep = init_params(k_params)
    idx = jax.random.randint(
        k_idx, (2, 8), 0, CFG.padded_vocab_size, dtype=jnp.int32
    )  # (B=2, T=8) token ids

    logits = jax.jit(gpt_forward)(idx, prep)
    logits = jax.block_until_ready(logits)
    assert logits.shape == (2, 8, CFG.padded_vocab_size)
    assert bool(jnp.all(jnp.isfinite(logits)))
    print("KERNEL_OK")
</pallas_src>

<mosaic_0001>
module attributes {stable_mosaic.version = 11 : i64} {
  func.func @_head_kernel(%arg0: i32, %arg1: memref<16x32xf32, #tpu.memory_space<vmem>>, %arg2: memref<1x32xf32, #tpu.memory_space<vmem>>, %arg3: memref<32x128xbf16, #tpu.memory_space<vmem>>, %arg4: memref<16x128xf32, #tpu.memory_space<vmem>>, %arg5: memref<16x32xbf16, #tpu.memory_space<vmem>>) attributes {dimension_semantics = [#tpu.dimension_semantics<arbitrary>], iteration_bounds = array<i64: 1>, scalar_prefetch = 0 : i64, scratch_operands = 1 : i64, tpu.core_type = #tpu.core_type<tc>, window_params = [{pipeline_mode = #tpu.pipeline_mode<synchronous>, transform_indices = @transform_0, window_bounds = array<i64: 16, 32>}, {pipeline_mode = #tpu.pipeline_mode<synchronous>, transform_indices = @transform_1, window_bounds = array<i64: 1, 32>}, {transform_indices = @transform_2, window_bounds = array<i64: 32, 128>}, {transform_indices = @transform_3, window_bounds = array<i64: 16, 128>}]} {
    %c0_i32 = arith.constant 0 : i32
    %0 = arith.cmpi eq, %arg0, %c0_i32 : i32
    %1 = arith.extui %0 : i1 to i32
    %c0_i32_0 = arith.constant 0 : i32
    %2 = arith.cmpi ne, %1, %c0_i32_0 : i32
    scf.if %2 {
      %c0_6 = arith.constant 0 : index
      %c0_7 = arith.constant 0 : index
      %7 = vector.load %arg1[%c0_6, %c0_7] : memref<16x32xf32, #tpu.memory_space<vmem>>, vector<16x32xf32>
      %8 = arith.mulf %7, %7 : vector<16x32xf32>
      %cst_8 = arith.constant dense<0.000000e+00> : vector<16xf32>
      %9 = vector.multi_reduction <add>, %8, %cst_8 [1] : vector<16x32xf32> to vector<16xf32>
      %10 = vector.shape_cast %9 : vector<16xf32> to vector<16x1xf32>
      %cst_9 = arith.constant 3.200000e+01 : f32
      %11 = vector.broadcast %cst_9 : f32 to vector<16x1xf32>
      %12 = arith.divf %10, %11 : vector<16x1xf32>
      %cst_10 = arith.constant 9.99999974E-6 : f32
      %13 = vector.broadcast %cst_10 : f32 to vector<16x1xf32>
      %14 = arith.addf %12, %13 : vector<16x1xf32>
      %15 = math.rsqrt %14 : vector<16x1xf32>
      %16 = vector.broadcast %15 : vector<16x1xf32> to vector<16x32xf32>
      %17 = arith.mulf %7, %16 : vector<16x32xf32>
      %c0_11 = arith.constant 0 : index
      %c0_12 = arith.constant 0 : index
      %18 = vector.load %arg2[%c0_11, %c0_12] : memref<1x32xf32, #tpu.memory_space<vmem>>, vector<1x32xf32>
      %19 = vector.broadcast %18 : vector<1x32xf32> to vector<16x32xf32>
      %20 = arith.mulf %17, %19 : vector<16x32xf32>
      %21 = arith.truncf %20 : vector<16x32xf32> to vector<16x32xbf16>
      %c0_13 = arith.constant 0 : index
      %c0_14 = arith.constant 0 : index
      %22 = vector.load %arg5[%c0_13, %c0_14] : memref<16x32xbf16, #tpu.memory_space<vmem>>, vector<16x32xbf16>
      tpu.vector_store %arg5[%c0_13, %c0_14], %21 {strides = array<i32>} : memref<16x32xbf16, #tpu.memory_space<vmem>>, vector<16x32xbf16>,
    } else {
    }
    %c0 = arith.constant 0 : index
    %c0_1 = arith.constant 0 : index
    %3 = vector.load %arg5[%c0, %c0_1] : memref<16x32xbf16, #tpu.memory_space<vmem>>, vector<16x32xbf16>
    %c0_2 = arith.constant 0 : index
    %c0_3 = arith.constant 0 : index
    %4 = vector.load %arg3[%c0_2, %c0_3] : memref<32x128xbf16, #tpu.memory_space<vmem>>, vector<32x128xbf16>
    %cst = arith.constant dense<0.000000e+00> : vector<16x128xf32>
    %5 = tpu.matmul %3, %4, %cst {dimension_numbers = #tpu.dot_dimension_numbers<[1], [0], [0], [1], [0, 0, 1, 1], [], []>} : vector<16x32xbf16>, vector<32x128xbf16>, vector<16x128xf32> -> vector<16x128xf32>
    %c0_4 = arith.constant 0 : index
    %c0_5 = arith.constant 0 : index
    %6 = vector.load %arg4[%c0_4, %c0_5] : memref<16x128xf32, #tpu.memory_space<vmem>>, vector<16x128xf32>
    tpu.vector_store %arg4[%c0_4, %c0_5], %5 {strides = array<i32>} : memref<16x128xf32, #tpu.memory_space<vmem>>, vector<16x128xf32>,
    return
  }
  func.func @transform_0(%arg0: i32) -> (i32, i32) {
    %c0_i32 = arith.constant 0 : i32
    %c0_i32_0 = arith.constant 0 : i32
    %c0_i32_1 = arith.constant 0 : i32
    return %c0_i32, %c0_i32_0 : i32, i32
  }
  func.func @transform_1(%arg0: i32) -> (i32, i32) {
    %c0_i32 = arith.constant 0 : i32
    %c0_i32_0 = arith.constant 0 : i32
    %c0_i32_1 = arith.constant 0 : i32
    return %c0_i32, %c0_i32_0 : i32, i32
  }
  func.func @transform_2(%arg0: i32) -> (i32, i32) {
    %c0_i32 = arith.constant 0 : i32
    %c0_i32_0 = arith.constant 0 : i32
    return %c0_i32, %arg0 : i32, i32
  }
  func.func @transform_3(%arg0: i32) -> (i32, i32) {
    %c0_i32 = arith.constant 0 : i32
    %c0_i32_0 = arith.constant 0 : i32
    return %c0_i32, %arg0 : i32, i32
  }
}

module attributes {stable_mosaic.version = 11 : i64} {
  func.func @_stack_kernel(%arg0: i32, %arg1: memref<16x32xf32, #tpu.memory_space<vmem>>, %arg2: memref<16x96xf32, #tpu.memory_space<vmem>>, %arg3: memref<16x96xf32, #tpu.memory_space<vmem>>, %arg4: memref<1x1x32xf32, #tpu.memory_space<vmem>>, %arg5: memref<1x1x32xf32, #tpu.memory_space<vmem>>, %arg6: memref<1x32x96xbf16, #tpu.memory_space<vmem>>, %arg7: memref<1x32x96xbf16, #tpu.memory_space<vmem>>, %arg8: memref<1x32x32xbf16, #tpu.memory_space<vmem>>, %arg9: memref<1x32x128xbf16, #tpu.memory_space<vmem>>, %arg10: memref<1x64x32xbf16, #tpu.memory_space<vmem>>, %arg11: memref<16x32xf32, #tpu.memory_space<vmem>>) attributes {dimension_semantics = [#tpu.dimension_semantics<arbitrary>], iteration_bounds = array<i64: 2>, scalar_prefetch = 0 : i64, scratch_operands = 0 : i64, tpu.core_type = #tpu.core_type<tc>, window_params = [{pipeline_mode = #tpu.pipeline_mode<synchronous>, transform_indices = @transform_0, window_bounds = array<i64: 16, 32>}, {pipeline_mode = #tpu.pipeline_mode<synchronous>, transform_indices = @transform_1, window_bounds = array<i64: 16, 96>}, {pipeline_mode = #tpu.pipeline_mode<synchronous>, transform_indices = @transform_2, window_bounds = array<i64: 16, 96>}, {transform_indices = @transform_3, window_bounds = array<i64: 1, 1, 32>}, {transform_indices = @transform_4, window_bounds = array<i64: 1, 1, 32>}, {transform_indices = @transform_5, window_bounds = array<i64: 1, 32, 96>}, {transform_indices = @transform_6, window_bounds = array<i64: 1, 32, 96>}, {transform_indices = @transform_7, window_bounds = array<i64: 1, 32, 32>}, {transform_indices = @transform_8, window_bounds = array<i64: 1, 32, 128>}, {transform_indices = @transform_9, window_bounds = array<i64: 1, 64, 32>}, {pipeline_mode = #tpu.pipeline_mode<synchronous>, transform_indices = @transform_10, window_bounds = array<i64: 16, 32>}]} {
    %c0_i32 = arith.constant 0 : i32
    %0 = arith.cmpi eq, %arg0, %c0_i32 : i32
    %1 = arith.extui %0 : i1 to i32
    %c0_i32_0 = arith.constant 0 : i32
    %2 = arith.cmpi ne, %1, %c0_i32_0 : i32
    scf.if %2 {
      %c0_60 = arith.constant 0 : index
      %c0_61 = arith.constant 0 : index
      %158 = vector.load %arg1[%c0_60, %c0_61] : memref<16x32xf32, #tpu.memory_space<vmem>>, vector<16x32xf32>
      %c0_62 = arith.constant 0 : index
      %c0_63 = arith.constant 0 : index
      %159 = vector.load %arg11[%c0_62, %c0_63] : memref<16x32xf32, #tpu.memory_space<vmem>>, vector<16x32xf32>
      tpu.vector_store %arg11[%c0_62, %c0_63], %158 {strides = array<i32>} : memref<16x32xf32, #tpu.memory_space<vmem>>, vector<16x32xf32>,
    } else {
    }
    %c0 = arith.constant 0 : index
    %c0_1 = arith.constant 0 : index
    %3 = vector.load %arg11[%c0, %c0_1] : memref<16x32xf32, #tpu.memory_space<vmem>>, vector<16x32xf32>
    %4 = tpu.iota {dimensions = array<i32: 0>} : vector<8x8xi32>
    %5 = tpu.iota {dimensions = array<i32: 1>} : vector<8x8xi32>
    %6 = arith.cmpi sle, %5, %4 : vector<8x8xi32>
    %7 = arith.mulf %3, %3 : vector<16x32xf32>
    %cst = arith.constant dense<0.000000e+00> : vector<16xf32>
    %8 = vector.multi_reduction <add>, %7, %cst [1] : vector<16x32xf32> to vector<16xf32>
    %9 = vector.shape_cast %8 : vector<16xf32> to vector<16x1xf32>
    %cst_2 = arith.constant 3.200000e+01 : f32
    %10 = vector.broadcast %cst_2 : f32 to vector<16x1xf32>
    %11 = arith.divf %9, %10 : vector<16x1xf32>
    %cst_3 = arith.constant 9.99999974E-6 : f32
    %12 = vector.broadcast %cst_3 : f32 to vector<16x1xf32>
    %13 = arith.addf %11, %12 : vector<16x1xf32>
    %14 = math.rsqrt %13 : vector<16x1xf32>
    %15 = vector.broadcast %14 : vector<16x1xf32> to vector<16x32xf32>
    %16 = arith.mulf %3, %15 : vector<16x32xf32>
    %c0_4 = arith.constant 0 : index
    %c0_5 = arith.constant 0 : index
    %c0_6 = arith.constant 0 : index
    %17 = vector.load %arg4[%c0_4, %c0_5, %c0_6] : memref<1x1x32xf32, #tpu.memory_space<vmem>>, vector<1x1x32xf32>
    %18 = vector.shape_cast %17 : vector<1x1x32xf32> to vector<1x32xf32>
    %19 = vector.broadcast %18 : vector<1x32xf32> to vector<16x32xf32>
    %20 = arith.mulf %16, %19 : vector<16x32xf32>
    %21 = arith.truncf %20 : vector<16x32xf32> to vector<16x32xbf16>
    %c0_7 = arith.constant 0 : index
    %c0_8 = arith.constant 0 : index
    %c0_9 = arith.constant 0 : index
    %22 = vector.load %arg6[%c0_7, %c0_8, %c0_9] : memref<1x32x96xbf16, #tpu.memory_space<vmem>>, vector<1x32x96xbf16>
    %23 = vector.shape_cast %22 : vector<1x32x96xbf16> to vector<32x96xbf16>
    %cst_10 = arith.constant dense<0.000000e+00> : vector<16x96xf32>
    %24 = tpu.matmul %21, %23, %cst_10 {dimension_numbers = #tpu.dot_dimension_numbers<[1], [0], [0], [1], [0, 0, 1, 1], [], []>} : vector<16x32xbf16>, vector<32x96xbf16>, vector<16x96xf32> -> vector<16x96xf32>
    %c0_11 = arith.constant 0 : index
    %c0_12 = arith.constant 0 : index
    %c0_13 = arith.constant 0 : index
    %25 = vector.load %arg7[%c0_11, %c0_12, %c0_13] : memref<1x32x96xbf16, #tpu.memory_space<vmem>>, vector<1x32x96xbf16>
    %26 = vector.shape_cast %25 : vector<1x32x96xbf16> to vector<32x96xbf16>
    %cst_14 = arith.constant dense<0.000000e+00> : vector<16x96xf32>
    %27 = tpu.matmul %21, %26, %cst_14 {dimension_numbers = #tpu.dot_dimension_numbers<[1], [0], [0], [1], [0, 0, 1, 1], [], []>} : vector<16x32xbf16>, vector<32x96xbf16>, vector<16x96xf32> -> vector<16x96xf32>
    %c0_15 = arith.constant 0 : index
    %c0_16 = arith.constant 0 : index
    %28 = vector.load %arg2[%c0_15, %c0_16] : memref<16x96xf32, #tpu.memory_space<vmem>>, vector<16x96xf32>
    %29 = arith.mulf %24, %28 : vector<16x96xf32>
    %c0_17 = arith.constant 0 : index
    %c0_18 = arith.constant 0 : index
    %30 = vector.load %arg3[%c0_17, %c0_18] : memref<16x96xf32, #tpu.memory_space<vmem>>, vector<16x96xf32>
    %31 = arith.mulf %27, %30 : vector<16x96xf32>
    %32 = arith.addf %29, %31 : vector<16x96xf32>
    %33 = vector.extract_strided_slice %32 {offsets = [0, 0], sizes = [8, 16], strides = [1, 1]} : vector<16x96xf32> to vector<8x16xf32>
    %34 = arith.truncf %33 : vector<8x16xf32> to vector<8x16xbf16>
    %35 = vector.extract_strided_slice %32 {offsets = [0, 32], sizes = [8, 16], strides = [1, 1]} : vector<16x96xf32> to vector<8x16xf32>
    %36 = arith.truncf %35 : vector<8x16xf32> to vector<8x16xbf16>
    %37 = vector.extract_strided_slice %32 {offsets = [0, 64], sizes = [8, 16], strides = [1, 1]} : vector<16x96xf32> to vector<8x16xf32>
    %38 = arith.truncf %37 : vector<8x16xf32> to vector<8x16xbf16>
    %cst_19 = arith.constant dense<0.000000e+00> : vector<8x8xf32>
    %39 = tpu.matmul %34, %36, %cst_19 {dimension_numbers = #tpu.dot_dimension_numbers<[1], [1], [0], [0], [0, 0, 1, 0], [], []>} : vector<8x16xbf16>, vector<8x16xbf16>, vector<8x8xf32> -> vector<8x8xf32>
    %cst_20 = arith.constant 0xFF800000 : f32
    %40 = vector.broadcast %cst_20 : f32 to vector<8x8xf32>
    %41 = arith.select %6, %39, %40 : vector<8x8xi1>, vector<8x8xf32>
    %cst_21 = arith.constant dense<0xFF800000> : vector<8xf32>
    %42 = vector.multi_reduction <maximumf>, %41, %cst_21 [1] : vector<8x8xf32> to vector<8xf32>
    %43 = vector.shape_cast %42 : vector<8xf32> to vector<8x1xf32>
    %44 = vector.broadcast %43 : vector<8x1xf32> to vector<8x8xf32>
    %45 = arith.subf %41, %44 : vector<8x8xf32>
    %46 = math.exp %45 : vector<8x8xf32>
    %cst_22 = arith.constant dense<0.000000e+00> : vector<8xf32>
    %47 = vector.multi_reduction <add>, %46, %cst_22 [1] : vector<8x8xf32> to vector<8xf32>
    %48 = vector.shape_cast %47 : vector<8xf32> to vector<8x1xf32>
    %49 = arith.truncf %46 : vector<8x8xf32> to vector<8x8xbf16>
    %cst_23 = arith.constant dense<0.000000e+00> : vector<8x16xf32>
    %50 = tpu.matmul %49, %38, %cst_23 {dimension_numbers = #tpu.dot_dimension_numbers<[1], [0], [0], [1], [0, 0, 1, 1], [], []>} : vector<8x8xbf16>, vector<8x16xbf16>, vector<8x16xf32> -> vector<8x16xf32>
    %51 = tpu.reciprocal %48 {approx = true} : vector<8x1xf32> -> vector<8x1xf32>
    %52 = vector.broadcast %51 : vector<8x1xf32> to vector<8x16xf32>
    %53 = arith.mulf %50, %52 : vector<8x16xf32>
    %54 = vector.extract_strided_slice %32 {offsets = [0, 16], sizes = [8, 16], strides = [1, 1]} : vector<16x96xf32> to vector<8x16xf32>
    %55 = arith.truncf %54 : vector<8x16xf32> to vector<8x16xbf16>
    %56 = vector.extract_strided_slice %32 {offsets = [0, 48], sizes = [8, 16], strides = [1, 1]} : vector<16x96xf32> to vector<8x16xf32>
    %57 = arith.truncf %56 : vector<8x16xf32> to vector<8x16xbf16>
    %58 = vector.extract_strided_slice %32 {offsets = [0, 80], sizes = [8, 16], strides = [1, 1]} : vector<16x96xf32> to vector<8x16xf32>
    %59 = arith.truncf %58 : vector<8x16xf32> to vector<8x16xbf16>
    %cst_24 = arith.constant dense<0.000000e+00> : vector<8x8xf32>
    %60 = tpu.matmul %55, %57, %cst_24 {dimension_numbers = #tpu.dot_dimension_numbers<[1], [1], [0], [0], [0, 0, 1, 0], [], []>} : vector<8x16xbf16>, vector<8x16xbf16>, vector<8x8xf32> -> vector<8x8xf32>
    %cst_25 = arith.constant 0xFF800000 : f32
    %61 = vector.broadcast %cst_25 : f32 to vector<8x8xf32>
    %62 = arith.select %6, %60, %61 : vector<8x8xi1>, vector<8x8xf32>
    %cst_26 = arith.constant dense<0xFF800000> : vector<8xf32>
    %63 = vector.multi_reduction <maximumf>, %62, %cst_26 [1] : vector<8x8xf32> to vector<8xf32>
    %64 = vector.shape_cast %63 : vector<8xf32> to vector<8x1xf32>
    %65 = vector.broadcast %64 : vector<8x1xf32> to vector<8x8xf32>
    %66 = arith.subf %62, %65 : vector<8x8xf32>
    %67 = math.exp %66 : vector<8x8xf32>
    %cst_27 = arith.constant dense<0.000000e+00> : vector<8xf32>
    %68 = vector.multi_reduction <add>, %67, %cst_27 [1] : vector<8x8xf32> to vector<8xf32>
    %69 = vector.shape_cast %68 : vector<8xf32> to vector<8x1xf32>
    %70 = arith.truncf %67 : vector<8x8xf32> to vector<8x8xbf16>
    %cst_28 = arith.constant dense<0.000000e+00> : vector<8x16xf32>
    %71 = tpu.matmul %70, %59, %cst_28 {dimension_numbers = #tpu.dot_dimension_numbers<[1], [0], [0], [1], [0, 0, 1, 1], [], []>} : vector<8x8xbf16>, vector<8x16xbf16>, vector<8x16xf32> -> vector<8x16xf32>
    %72 = tpu.reciprocal %69 {approx = true} : vector<8x1xf32> -> vector<8x1xf32>
    %73 = vector.broadcast %72 : vector<8x1xf32> to vector<8x16xf32>
    %74 = arith.mulf %71, %73 : vector<8x16xf32>
    %75 = tpu.concatenate %53, %74 in 1 : vector<8x16xf32>, vector<8x16xf32> -> vector<8x32xf32>
    %76 = vector.extract_strided_slice %32 {offsets = [8, 0], sizes = [8, 16], strides = [1, 1]} : vector<16x96xf32> to vector<8x16xf32>
    %77 = arith.truncf %76 : vector<8x16xf32> to vector<8x16xbf16>
    %78 = vector.extract_strided_slice %32 {offsets = [8, 32], sizes = [8, 16], strides = [1, 1]} : vector<16x96xf32> to vector<8x16xf32>
    %79 = arith.truncf %78 : vector<8x16xf32> to vector<8x16xbf16>
    %80 = vector.extract_strided_slice %32 {offsets = [8, 64], sizes = [8, 16], strides = [1, 1]} : vector<16x96xf32> to vector<8x16xf32>
    %81 = arith.truncf %80 : vector<8x16xf32> to vector<8x16xbf16>
    %cst_29 = arith.constant dense<0.000000e+00> : vector<8x8xf32>
    %82 = tpu.matmul %77, %79, %cst_29 {dimension_numbers = #tpu.dot_dimension_numbers<[1], [1], [0], [0], [0, 0, 1, 0], [], []>} : vector<8x16xbf16>, vector<8x16xbf16>, vector<8x8xf32> -> vector<8x8xf32>
    %cst_30 = arith.constant 0xFF800000 : f32
    %83 = vector.broadcast %cst_30 : f32 to vector<8x8xf32>
    %84 = arith.select %6, %82, %83 : vector<8x8xi1>, vector<8x8xf32>
    %cst_31 = arith.constant dense<0xFF800000> : vector<8xf32>
    %85 = vector.multi_reduction <maximumf>, %84, %cst_31 [1] : vector<8x8xf32> to vector<8xf32>
    %86 = vector.shape_cast %85 : vector<8xf32> to vector<8x1xf32>
    %87 = vector.broadcast %86 : vector<8x1xf32> to vector<8x8xf32>
    %88 = arith.subf %84, %87 : vector<8x8xf32>
    %89 = math.exp %88 : vector<8x8xf32>
    %cst_32 = arith.constant dense<0.000000e+00> : vector<8xf32>
    %90 = vector.multi_reduction <add>, %89, %cst_32 [1] : vector<8x8xf32> to vector<8xf32>
    %91 = vector.shape_cast %90 : vector<8xf32> to vector<8x1xf32>
    %92 = arith.truncf %89 : vector<8x8xf32> to vector<8x8xbf16>
    %cst_33 = arith.constant dense<0.000000e+00> : vector<8x16xf32>
    %93 = tpu.matmul %92, %81, %cst_33 {dimension_numbers = #tpu.dot_dimension_numbers<[1], [0], [0], [1], [0, 0, 1, 1], [], []>} : vector<8x8xbf16>, vector<8x16xbf16>, vector<8x16xf32> -> vector<8x16xf32>
    %94 = tpu.reciprocal %91 {approx = true} : vector<8x1xf32> -> vector<8x1xf32>
    %95 = vector.broadcast %94 : vector<8x1xf32> to vector<8x16xf32>
    %96 = arith.mulf %93, %95 : vector<8x16xf32>
    %97 = vector.extract_strided_slice %32 {offsets = [8, 16], sizes = [8, 16], strides = [1, 1]} : vector<16x96xf32> to vector<8x16xf32>
    %98 = arith.truncf %97 : vector<8x16xf32> to vector<8x16xbf16>
    %99 = vector.extract_strided_slice %32 {offsets = [8, 48], sizes = [8, 16], strides = [1, 1]} : vector<16x96xf32> to vector<8x16xf32>
    %100 = arith.truncf %99 : vector<8x16xf32> to vector<8x16xbf16>
    %101 = vector.extract_strided_slice %32 {offsets = [8, 80], sizes = [8, 16], strides = [1, 1]} : vector<16x96xf32> to vector<8x16xf32>
    %102 = arith.truncf %101 : vector<8x16xf32> to vector<8x16xbf16>
    %cst_34 = arith.constant dense<0.000000e+00> : vector<8x8xf32>
    %103 = tpu.matmul %98, %100, %cst_34 {dimension_numbers = #tpu.dot_dimension_numbers<[1], [1], [0], [0], [0, 0, 1, 0], [], []>} : vector<8x16xbf16>, vector<8x16xbf16>, vector<8x8xf32> -> vector<8x8xf32>
    %cst_35 = arith.constant 0xFF800000 : f32
    %104 = vector.broadcast %cst_35 : f32 to vector<8x8xf32>
    %105 = arith.select %6, %103, %104 : vector<8x8xi1>, vector<8x8xf32>
    %cst_36 = arith.constant dense<0xFF800000> : vector<8xf32>
    %106 = vector.multi_reduction <maximumf>, %105, %cst_36 [1] : vector<8x8xf32> to vector<8xf32>
    %107 = vector.shape_cast %106 : vector<8xf32> to vector<8x1xf32>
    %108 = vector.broadcast %107 : vector<8x1xf32> to vector<8x8xf32>
    %109 = arith.subf %105, %108 : vector<8x8xf32>
    %110 = math.exp %109 : vector<8x8xf32>
    %cst_37 = arith.constant dense<0.000000e+00> : vector<8xf32>
    %111 = vector.multi_reduction <add>, %110, %cst_37 [1] : vector<8x8xf32> to vector<8xf32>
    %112 = vector.shape_cast %111 : vector<8xf32> to vector<8x1xf32>
    %113 = arith.truncf %110 : vector<8x8xf32> to vector<8x8xbf16>
    %cst_38 = arith.constant dense<0.000000e+00> : vector<8x16xf32>
    %114 = tpu.matmul %113, %102, %cst_38 {dimension_numbers = #tpu.dot_dimension_numbers<[1], [0], [0], [1], [0, 0, 1, 1], [], []>} : vector<8x8xbf16>, vector<8x16xbf16>, vector<8x16xf32> -> vector<8x16xf32>
    %115 = tpu.reciprocal %112 {approx = true} : vector<8x1xf32> -> vector<8x1xf32>
    %116 = vector.broadcast %115 : vector<8x1xf32> to vector<8x16xf32>
    %117 = arith.mulf %114, %116 : vector<8x16xf32>
    %118 = tpu.concatenate %96, %117 in 1 : vector<8x16xf32>, vector<8x16xf32> -> vector<8x32xf32>
    %119 = tpu.concatenate %75, %118 in 0 : vector<8x32xf32>, vector<8x32xf32> -> vector<16x32xf32>
    %120 = arith.truncf %119 : vector<16x32xf32> to vector<16x32xbf16>
    %c0_39 = arith.constant 0 : index
    %c0_40 = arith.constant 0 : index
    %c0_41 = arith.constant 0 : index
    %121 = vector.load %arg8[%c0_39, %c0_40, %c0_41] : memref<1x32x32xbf16, #tpu.memory_space<vmem>>, vector<1x32x32xbf16>
    %122 = vector.shape_cast %121 : vector<1x32x32xbf16> to vector<32x32xbf16>
    %cst_42 = arith.constant dense<0.000000e+00> : vector<16x32xf32>
    %123 = tpu.matmul %120, %122, %cst_42 {dimension_numbers = #tpu.dot_dimension_numbers<[1], [0], [0], [1], [0, 0, 1, 1], [], []>} : vector<16x32xbf16>, vector<32x32xbf16>, vector<16x32xf32> -> vector<16x32xf32>
    %124 = arith.addf %3, %123 : vector<16x32xf32>
    %125 = arith.mulf %124, %124 : vector<16x32xf32>
    %cst_43 = arith.constant dense<0.000000e+00> : vector<16xf32>
    %126 = vector.multi_reduction <add>, %125, %cst_43 [1] : vector<16x32xf32> to vector<16xf32>
    %127 = vector.shape_cast %126 : vector<16xf32> to vector<16x1xf32>
    %cst_44 = arith.constant 3.200000e+01 : f32
    %128 = vector.broadcast %cst_44 : f32 to vector<16x1xf32>
    %129 = arith.divf %127, %128 : vector<16x1xf32>
    %cst_45 = arith.constant 9.99999974E-6 : f32
    %130 = vector.broadcast %cst_45 : f32 to vector<16x1xf32>
    %131 = arith.addf %129, %130 : vector<16x1xf32>
    %132 = math.rsqrt %131 : vector<16x1xf32>
    %133 = vector.broadcast %132 : vector<16x1xf32> to vector<16x32xf32>
    %134 = arith.mulf %124, %133 : vector<16x32xf32>
    %c0_46 = arith.constant 0 : index
    %c0_47 = arith.constant 0 : index
    %c0_48 = arith.constant 0 : index
    %135 = vector.load %arg5[%c0_46, %c0_47, %c0_48] : memref<1x1x32xf32, #tpu.memory_space<vmem>>, vector<1x1x32xf32>
    %136 = vector.shape_cast %135 : vector<1x1x32xf32> to vector<1x32xf32>
    %137 = vector.broadcast %136 : vector<1x32xf32> to vector<16x32xf32>
    %138 = arith.mulf %134, %137 : vector<16x32xf32>
    %139 = arith.truncf %138 : vector<16x32xf32> to vector<16x32xbf16>
    %c0_49 = arith.constant 0 : index
    %c0_50 = arith.constant 0 : index
    %c0_51 = arith.constant 0 : index
    %140 = vector.load %arg9[%c0_49, %c0_50, %c0_51] : memref<1x32x128xbf16, #tpu.memory_space<vmem>>, vector<1x32x128xbf16>
    %141 = vector.shape_cast %140 : vector<1x32x128xbf16> to vector<32x128xbf16>
    %cst_52 = arith.constant dense<0.000000e+00> : vector<16x128xf32>
    %142 = tpu.matmul %139, %141, %cst_52 {dimension_numbers = #tpu.dot_dimension_numbers<[1], [0], [0], [1], [0, 0, 1, 1], [], []>} : vector<16x32xbf16>, vector<32x128xbf16>, vector<16x128xf32> -> vector<16x128xf32>
    %143 = vector.extract_strided_slice %142 {offsets = [0, 0], sizes = [16, 64], strides = [1, 1]} : vector<16x128xf32> to vector<16x64xf32>
    %144 = vector.extract_strided_slice %142 {offsets = [0, 64], sizes = [16, 64], strides = [1, 1]} : vector<16x128xf32> to vector<16x64xf32>
    %145 = arith.negf %143 : vector<16x64xf32>
    %146 = math.exp %145 : vector<16x64xf32>
    %cst_53 = arith.constant 1.000000e+00 : f32
    %147 = vector.broadcast %cst_53 : f32 to vector<16x64xf32>
    %148 = arith.addf %147, %146 : vector<16x64xf32>
    %149 = arith.divf %147, %148 : vector<16x64xf32>
    %150 = arith.mulf %143, %149 : vector<16x64xf32>
    %151 = arith.mulf %150, %144 : vector<16x64xf32>
    %152 = arith.truncf %151 : vector<16x64xf32> to vector<16x64xbf16>
    %c0_54 = arith.constant 0 : index
    %c0_55 = arith.constant 0 : index
    %c0_56 = arith.constant 0 : index
    %153 = vector.load %arg10[%c0_54, %c0_55, %c0_56] : memref<1x64x32xbf16, #tpu.memory_space<vmem>>, vector<1x64x32xbf16>
    %154 = vector.shape_cast %153 : vector<1x64x32xbf16> to vector<64x32xbf16>
    %cst_57 = arith.constant dense<0.000000e+00> : vector<16x32xf32>
    %155 = tpu.matmul %152, %154, %cst_57 {dimension_numbers = #tpu.dot_dimension_numbers<[1], [0], [0], [1], [0, 0, 1, 1], [], []>} : vector<16x64xbf16>, vector<64x32xbf16>, vector<16x32xf32> -> vector<16x32xf32>
    %156 = arith.addf %124, %155 : vector<16x32xf32>
    %c0_58 = arith.constant 0 : index
    %c0_59 = arith.constant 0 : index
    %157 = vector.load %arg11[%c0_58, %c0_59] : memref<16x32xf32, #tpu.memory_space<vmem>>, vector<16x32xf32>
    tpu.vector_store %arg11[%c0_58, %c0_59], %156 {strides = array<i32>} : memref<16x32xf32, #tpu.memory_space<vmem>>, vector<16x32xf32>,
    return
  }
  func.func @transform_0(%arg0: i32) -> (i32, i32) {
    %c0_i32 = arith.constant 0 : i32
    %c0_i32_0 = arith.constant 0 : i32
    %c0_i32_1 = arith.constant 0 : i32
    return %c0_i32, %c0_i32_0 : i32, i32
  }
  func.func @transform_1(%arg0: i32) -> (i32, i32) {
    %c0_i32 = arith.constant 0 : i32
    %c0_i32_0 = arith.constant 0 : i32
    %c0_i32_1 = arith.constant 0 : i32
    return %c0_i32, %c0_i32_0 : i32, i32
  }
  func.func @transform_2(%arg0: i32) -> (i32, i32) {
    %c0_i32 = arith.constant 0 : i32
    %c0_i32_0 = arith.constant 0 : i32
    %c0_i32_1 = arith.constant 0 : i32
    return %c0_i32, %c0_i32_0 : i32, i32
  }
  func.func @transform_3(%arg0: i32) -> (i32, i32, i32) {
    %c0_i32 = arith.constant 0 : i32
    %c0_i32_0 = arith.constant 0 : i32
    %c0_i32_1 = arith.constant 0 : i32
    return %arg0, %c0_i32, %c0_i32_0 : i32, i32, i32
  }
  func.func @transform_4(%arg0: i32) -> (i32, i32, i32) {
    %c0_i32 = arith.constant 0 : i32
    %c0_i32_0 = arith.constant 0 : i32
    %c0_i32_1 = arith.constant 0 : i32
    return %arg0, %c0_i32, %c0_i32_0 : i32, i32, i32
  }
  func.func @transform_5(%arg0: i32) -> (i32, i32, i32) {
    %c0_i32 = arith.constant 0 : i32
    %c0_i32_0 = arith.constant 0 : i32
    %c0_i32_1 = arith.constant 0 : i32
    return %arg0, %c0_i32, %c0_i32_0 : i32, i32, i32
  }
  func.func @transform_6(%arg0: i32) -> (i32, i32, i32) {
    %c0_i32 = arith.constant 0 : i32
    %c0_i32_0 = arith.constant 0 : i32
    %c0_i32_1 = arith.constant 0 : i32
    return %arg0, %c0_i32, %c0_i32_0 : i32, i32, i32
  }
  func.func @transform_7(%arg0: i32) -> (i32, i32, i32) {
    %c0_i32 = arith.constant 0 : i32
    %c0_i32_0 = arith.constant 0 : i32
    %c0_i32_1 = arith.constant 0 : i32
    return %arg0, %c0_i32, %c0_i32_0 : i32, i32, i32
  }
  func.func @transform_8(%arg0: i32) -> (i32, i32, i32) {
    %c0_i32 = arith.constant 0 : i32
    %c0_i32_0 = arith.constant 0 : i32
    %c0_i32_1 = arith.constant 0 : i32
    return %arg0, %c0_i32, %c0_i32_0 : i32, i32, i32
  }
  func.func @transform_9(%arg0: i32) -> (i32, i32, i32) {
    %c0_i32 = arith.constant 0 : i32
    %c0_i32_0 = arith.constant 0 : i32
    %c0_i32_1 = arith.constant 0 : i32
    return %arg0, %c0_i32, %c0_i32_0 : i32, i32, i32
  }
  func.func @transform_10(%arg0: i32) -> (i32, i32) {
    %c0_i32 = arith.constant 0 : i32
    %c0_i32_0 = arith.constant 0 : i32
    %c0_i32_1 = arith.constant 0 : i32
    return %c0_i32, %c0_i32_0 : i32, i32
  }
}

</mosaic_0001>

<llo_original>
// kernel: gpt_forward.3
$region0: #{gpt_forward.3}
  #allocation0 [shape = 'u32[]', space=smem, size = 0x4, offset = 0x4, fixed_abs, tag = 'smem constant byte address 0x4 - core index']
  #allocation1 [shape = 'u32[72,128]{1,0:T(1,128)}', space=vmem, size = 0x9000, scoped, tag = 'internal scratch']
  #allocation2 [shape = 'bf16[16,32]{1,0:T(8,128)(2,1)}', space=vmem, size = 0x1000, scoped, tag = 'scratch operand']
  %s0 = inlined_call_operand.vmem [shape: f32[16,32], index: 0, kind: input, shape index: {}]
  %s1 = inlined_call_operand.vmem [shape: f32[1,32], index: 1, kind: input, shape index: {}]
  %s2 = inlined_call_operand.vmem [shape: bf16[32,128], index: 2, kind: input, shape index: {}]
  %s3 = inlined_call_operand.hbm [shape: f32[16,128], index: 3, kind: output, shape index: {}]
  %s4 = sld [smem:[#allocation0]]
  $region26: #{gpt_forward.3} parent=0
    _
  %s6 = ssub.s32 1, %s4
  %s7 = scalar_select 0, %s6, %s4
  $region1: #{gpt_forward.3} parent=0
    #allocation3 [shape = 'u8[8192]{0}', space=vmem, size = 0x2000, scoped, tag = 'output window, operand 0, single buffered']
    #allocation4 [shape = 's32[1]{0}', space=sflag, size = 0x4, scoped, tag = 'scoped memory for gpt_forward.3']
    %8 = vsyncpa [#allocation4], 0
    // Predicated region
    $region2: #{gpt_forward.3} parent=1 // pred_check
      _
    $region3: #{gpt_forward.3} parent=1 // pred_check_branch
      %10 = sbr.rel (0) target = $region5
    $region4: #{gpt_forward.3} parent=1 // pred_region
      _
    $region5: #{gpt_forward.3} parent=1 // pred_fallthru
      _
    // Predicated region
    $region6: #{gpt_forward.3} parent=1 // pred_check
      _
    $region7: #{gpt_forward.3} parent=1 // pred_check_branch
      %12 = sbr.rel (0) target = $region9
    $region8: #{gpt_forward.3} parent=1 // pred_region
      _
    $region9: #{gpt_forward.3} parent=1 // pred_fallthru
      _
    // Predicated region
    $region10: #{gpt_forward.3} parent=1 // pred_check
      _
    $region11: #{gpt_forward.3} parent=1 // pred_check_branch
      %14 = sbr.rel (0) target = $region13
    $region12: #{gpt_forward.3} parent=1 // pred_region
      _
    $region13: #{gpt_forward.3} parent=1 // pred_fallthru
      _
    %p16 = scmp.eq.s32.totalorder 0, 0
    // Predicated region
    $region14: #{gpt_forward.3} parent=1 // pred_check
      %p17 = pneg %p16
    $region15: #{gpt_forward.3} parent=1 // pred_check_branch
      %19 = sbr.rel (%p17) target = $region17
    $region16: #{gpt_forward.3} parent=1 // pred_region
      %v20 = vld [vmem:[%s0] sm:$0xff]
      %v21 = vld [vmem:[%s0 + $0x8] sm:$0xff]
      %v22 = vmul.f32 %v20, %v20
      %v23 = vmul.f32 %v21, %v21
      %vm24 = vcmask 261120
      %v25 = vsel %vm24, %v22, 0.0
      %26 = vadd.xlane.f32.xlu0 %v25
      %v27 = vpop.xlane.xlu0 %26
      %v28 = vsel %vm24, %v23, 0.0
      %29 = vadd.xlane.f32.xlu0 %v28
      %v30 = vpop.xlane.xlu0 %29
      %v31 = vrcp.pop 32.0
      %v32 = vmul.f32 32.0, %v31
      %v33 = vsub.f32 1.0, %v32
      %v34 = vmul.f32 %v31, %v33
      %v35 = vadd.f32 %v31, %v34
      %vm36 = vweird.f32 %v31
      %v37 = vsel %vm36, %v31, %v35
      %v38 = vmul.f32 %v27, %v37
      %v39 = vmul.f32 %v30, %v37
      %v40 = vadd.f32 %v38, 1e-05
      %v41 = vadd.f32 %v39, 1e-05
      %v42 = vrsqrt.pop %v40
      %v43 = vmul.f32 %v42, %v40
      %v44 = vmul.f32 %v43, %v42
      %v45 = vmul.f32 0.5, %v44
      %v46 = vsub.f32 1.5, %v45
      %v47 = vmul.f32 %v42, %v46
      %vm48 = vweird.f32 %v40
      %vm49 = vweird.f32 %v42
      %vm50 = vmor %vm48, %vm49
      %v51 = vsel %vm50, %v42, %v47
      %v52 = vrsqrt.pop %v41
      %v53 = vmul.f32 %v52, %v41
      %v54 = vmul.f32 %v53, %v52
      %v55 = vmul.f32 0.5, %v54
      %v56 = vsub.f32 1.5, %v55
      %v57 = vmul.f32 %v52, %v56
      %vm58 = vweird.f32 %v41
      %vm59 = vweird.f32 %v52
      %vm60 = vmor %vm58, %vm59
      %v61 = vsel %vm60, %v52, %v57
      %v62 = vmul.f32 %v20, %v51
      %v63 = vmul.f32 %v21, %v61
      %v64 = vld [vmem:[%s1] sm:$0x1]
      %v66 = vperm.slane %v64, 0
      %v68 = vmul.f32 %v62, %v66
      %v69 = vmul.f32 %v63, %v66
      %v70 = vpack.c.bf16 %v68, %v68
      %v71 = vpack.c.bf16 %v69, %v69
      %vm72 = vcmask 257024
      %73 = vst.msk [vmem:[#allocation2] sm:$0xf] %vm72, %v70
      %74 = vst.msk [vmem:[#allocation2 + $0x4] sm:$0xf] %vm72, %v71
    $region17: #{gpt_forward.3} parent=1 // pred_fallthru
      _
    %v75 = vld [vmem:[#allocation2] sm:$0xf]
    %v76 = vld [vmem:[#allocation2 + $0x4] sm:$0xf]
    %v77 = vld [vmem:[%s2] sm:$0xf]
    %v78 = vld [vmem:[%s2 + $0x4] sm:$0xf]
    %v79 = vld [vmem:[%s2 + $0x8] sm:$0xf]
    %v80 = vld [vmem:[%s2 + $0xc] sm:$0xf]
    %v83 = vunpack.c.l.b16 %v75
    %v84 = vunpack.c.l.b16 %v76
    %v85 = vpack.c.b16 %v84, %v83
    %v90 = vunpack.c.l.b16 %v77
    %v91 = vunpack.c.l.b16 %v78
    %v92 = vunpack.c.l.b16 %v79
    %v93 = vunpack.c.l.b16 %v80
    %v94 = vpack.c.b16 %v91, %v90
    %v95 = vpack.c.b16 %v93, %v92
    %vm98 = vcmask 261120
    %v100 = vsel %vm98, %v85, 0
    %102 = vmatpush.bf16.msra.mxu0 0
    %103 = vmatpush.bf16.msra.mxu0 0
    %104 = vmatpush.bf16.msra.mxu0 0
    %105 = vmatpush.bf16.msra.mxu0 0
    %106 = vmatpush.bf16.msra.mxu0 0
    %107 = vmatpush.bf16.msra.mxu0 0
    %108 = vmatpush.bf16.msra.mxu0 %v95
    %109 = vmatpush.bf16.msra.mxu0 %v94
    %110 = vmatmul.bf16.gmra.mxu0 %v100
    %v111 = vpop.f32.mrf.mxu0
    %v112 = vadd.f32 0.0, %v111
    %v113 = vpop.f32.mrf.mxu0
    %v114 = vadd.f32 0.0, %v113
    %115 = vdwg.mxu0
    %116 = vst [vmem:[#allocation3] sm:$0xff] %v112
    %117 = vst [vmem:[#allocation3 + $0x8] sm:$0xff] %v114
    // Predicated region
    $region18: #{gpt_forward.3} parent=1 // pred_check
      _
    $region19: #{gpt_forward.3} parent=1 // pred_check_branch
      %119 = sbr.rel (0) target = $region21
    $region20: #{gpt_forward.3} parent=1 // pred_region
      %121 = vsyncadd [#allocation4], 0
      %s122 = sshll.u32 [#allocation3], 4
      %s123 = int_to_ptr.vmem [resolvable:$true] %s122
      %s124 = sshll.u32 %s3, 4
      %s125 = int_to_ptr.hbm [resolvable:$true] %s124
      %130 = dma.vmem_to_hbm [thread:$0]  %s123, 256, %s125, [#allocation4], 128, 128, 8
    $region21: #{gpt_forward.3} parent=1 // pred_fallthru
      _
    // Predicated region
    $region22: #{gpt_forward.3} parent=1 // pred_check
      _
    $region23: #{gpt_forward.3} parent=1 // pred_check_branch
      %132 = sbr.rel (0) target = $region25
    $region24: #{gpt_forward.3} parent=1 // pred_region
      %134 = dma.done [#allocation4], 256
    $region25: #{gpt_forward.3} parent=1 // pred_fallthru
      _
    %135 = vsyncpa [#allocation4], 1

// kernel: gpt_forward.2
$region0: #{gpt_forward.2}
  #allocation0 [shape = 'u32[]', space=smem, size = 0x4, offset = 0x4, fixed_abs, tag = 'smem constant byte address 0x4 - core index']
  #allocation1 [shape = 'u32[72,128]{1,0:T(1,128)}', space=vmem, size = 0x9000, scoped, tag = 'internal scratch']
  %s0 = inlined_call_operand.vmem [shape: f32[16,32], index: 0, kind: input, shape index: {}, may-alias: {0,10}]
  %s1 = inlined_call_operand.vmem [shape: f32[16,96], index: 1, kind: input, shape index: {}]
  %s2 = inlined_call_operand.vmem [shape: f32[16,96], index: 2, kind: input, shape index: {}]
  %s3 = inlined_call_operand.vmem [shape: f32[2,1,32], index: 3, kind: input, shape index: {}]
  %s4 = inlined_call_operand.vmem [shape: f32[2,1,32], index: 4, kind: input, shape index: {}]
  %s5 = inlined_call_operand.vmem [shape: bf16[2,32,96], index: 5, kind: input, shape index: {}]
  %s6 = inlined_call_operand.vmem [shape: bf16[2,32,96], index: 6, kind: input, shape index: {}]
  %s7 = inlined_call_operand.vmem [shape: bf16[2,32,32], index: 7, kind: input, shape index: {}]
  %s8 = inlined_call_operand.vmem [shape: bf16[2,32,128], index: 8, kind: input, shape index: {}]
  %s9 = inlined_call_operand.vmem [shape: bf16[2,64,32], index: 9, kind: input, shape index: {}]
  %s10 = inlined_call_operand.vmem [shape: f32[16,32], index: 10, kind: output, shape index: {}, may-alias: {0,10}]
  %s11 = sld [smem:[#allocation0]]
  $region77: #{gpt_forward.2} parent=0
    _
  %s13 = ssub.s32 1, %s11
  %s14 = scalar_select 0, %s13, %s11
  loop: start=0, step=1, limit=4
  $region2: #{gpt_forward.2} parent=0 // loop_pre_header
    _
  $region3: #{gpt_forward.2} parent=0 // loop_header
    %s16 = sphi 0, %s20
    %p17 = scmp.ge.s32.totalorder %s16, 4
    %s24 = sphi 0, %s24
    %s26 = sphi 0, %s24
    %s27 = sphi 0, %s26
    %s41 = sphi 0, %s27
    %s45 = sphi 0, %s45
    %s47 = sphi 0, %s45
    %s48 = sphi 0, %s47
    %s62 = sphi 0, %s48
    %s66 = sphi 0, %s66
    %s68 = sphi 0, %s66
    %s69 = sphi 0, %s68
    %s83 = sphi 0, %s69
    %s89 = sphi 0, %s91
    %s92 = sphi 0, %s89
    %s93 = sphi 0, %s92
    %s109 = sphi 0, %s93
    %s115 = sphi 0, %s117
    %s118 = sphi 0, %s115
    %s119 = sphi 0, %s118
    %s135 = sphi 0, %s119
    %s141 = sphi 0, %s143
    %s144 = sphi 0, %s141
    %s145 = sphi 0, %s144
    %s161 = sphi 0, %s145
    %s167 = sphi 0, %s169
    %s170 = sphi 0, %s167
    %s171 = sphi 0, %s170
    %s187 = sphi 0, %s171
    %s193 = sphi 0, %s195
    %s196 = sphi 0, %s193
    %s197 = sphi 0, %s196
    %s213 = sphi 0, %s197
    %s219 = sphi 0, %s221
    %s222 = sphi 0, %s219
    %s223 = sphi 0, %s222
    %s239 = sphi 0, %s223
    %s245 = sphi 0, %s247
    %s248 = sphi 0, %s245
    %s249 = sphi 0, %s248
    %s265 = sphi 0, %s249
    %s269 = sphi 0, %s269
    %s271 = sphi 0, %s269
    %s272 = sphi 0, %s271
    %s286 = sphi 0, %s272
  $region4: #{gpt_forward.2} parent=0 // loop_header_branch
    %19 = sbr.rel (%p17) target = $region8
  $region5: #{gpt_forward.2} parent=0 // loop_body
    %s21 = ssub.s32 %s16, 1
    %s22 = ssub.s32 %s16, 2
    %s23 = sadd.s32 %s16, 1
    %s25 = sadd.s32 %s24, 1
    %p28 = scmp.eq.s32.totalorder %s16, 1
    %p29 = scmp.ne.s32.totalorder %s24, %s26
    %p30 = scmp.eq.s32.totalorder %s16, 0
    %p31 = por %p29, %p30
    %p32 = scmp.ne.s32.totalorder %s24, %s26
    %p33 = scmp.eq.s32.totalorder %s21, 1
    %p34 = por %p32, %p33
    %p35 = scmp.ne.s32.totalorder %s26, %s27
    %p36 = scmp.eq.s32.totalorder %s21, 0
    %p37 = por %p35, %p36
    %p38 = scmp.ne.s32.totalorder %s26, %s27
    %p39 = scmp.eq.s32.totalorder %s22, 1
    %p40 = por %p38, %p39
    %p42 = scmp.ne.s32.totalorder %s27, %s41
    %p43 = scmp.eq.s32.totalorder %s22, 0
    %p44 = por %p42, %p43
    %s46 = sadd.s32 %s45, 1
    %p49 = scmp.eq.s32.totalorder %s16, 1
    %p50 = scmp.ne.s32.totalorder %s45, %s47
    %p51 = scmp.eq.s32.totalorder %s16, 0
    %p52 = por %p50, %p51
    %p53 = scmp.ne.s32.totalorder %s45, %s47
    %p54 = scmp.eq.s32.totalorder %s21, 1
    %p55 = por %p53, %p54
    %p56 = scmp.ne.s32.totalorder %s47, %s48
    %p57 = scmp.eq.s32.totalorder %s21, 0
    %p58 = por %p56, %p57
    %p59 = scmp.ne.s32.totalorder %s47, %s48
    %p60 = scmp.eq.s32.totalorder %s22, 1
    %p61 = por %p59, %p60
    %p63 = scmp.ne.s32.totalorder %s48, %s62
    %p64 = scmp.eq.s32.totalorder %s22, 0
    %p65 = por %p63, %p64
    %s67 = sadd.s32 %s66, 1
    %p70 = scmp.eq.s32.totalorder %s16, 1
    %p71 = scmp.ne.s32.totalorder %s66, %s68
    %p72 = scmp.eq.s32.totalorder %s16, 0
    %p73 = por %p71, %p72
    %p74 = scmp.ne.s32.totalorder %s66, %s68
    %p75 = scmp.eq.s32.totalorder %s21, 1
    %p76 = por %p74, %p75
    %p77 = scmp.ne.s32.totalorder %s68, %s69
    %p78 = scmp.eq.s32.totalorder %s21, 0
    %p79 = por %p77, %p78
    %p80 = scmp.ne.s32.totalorder %s68, %s69
    %p81 = scmp.eq.s32.totalorder %s22, 1
    %p82 = por %p80, %p81
    %p84 = scmp.ne.s32.totalorder %s69, %s83
    %p85 = scmp.eq.s32.totalorder %s22, 0
    %p86 = por %p84, %p85
    %s87 = ssub.s32 %s16, %s23
    %p88 = scmp.eq.s32.totalorder %s87, 0
    %s90 = sadd.s32 %s89, 1
    %s91 = scalar_select %p88, %s89, %s90
    %p94 = pneg %p88
    %p95 = scmp.eq.s32.totalorder %s16, 1
    %p96 = por %p94, %p95
    %p97 = scmp.ne.s32.totalorder %s89, %s92
    %p98 = scmp.eq.s32.totalorder %s16, 0
    %p99 = por %p97, %p98
    %p100 = scmp.ne.s32.totalorder %s89, %s92
    %p101 = scmp.eq.s32.totalorder %s21, 1
    %p102 = por %p100, %p101
    %p103 = scmp.ne.s32.totalorder %s92, %s93
    %p104 = scmp.eq.s32.totalorder %s21, 0
    %p105 = por %p103, %p104
    %p106 = scmp.ne.s32.totalorder %s92, %s93
    %p107 = scmp.eq.s32.totalorder %s22, 1
    %p108 = por %p106, %p107
    %p110 = scmp.ne.s32.totalorder %s93, %s109
    %p111 = scmp.eq.s32.totalorder %s22, 0
    %p112 = por %p110, %p111
    %s113 = ssub.s32 %s16, %s23
    %p114 = scmp.eq.s32.totalorder %s113, 0
    %s116 = sadd.s32 %s115, 1
    %s117 = scalar_select %p114, %s115, %s116
    %p120 = pneg %p114
    %p121 = scmp.eq.s32.totalorder %s16, 1
    %p122 = por %p120, %p121
    %p123 = scmp.ne.s32.totalorder %s115, %s118
    %p124 = scmp.eq.s32.totalorder %s16, 0
    %p125 = por %p123, %p124
    %p126 = scmp.ne.s32.totalorder %s115, %s118
    %p127 = scmp.eq.s32.totalorder %s21, 1
    %p128 = por %p126, %p127
    %p129 = scmp.ne.s32.totalorder %s118, %s119
    %p130 = scmp.eq.s32.totalorder %s21, 0
    %p131 = por %p129, %p130
    %p132 = scmp.ne.s32.totalorder %s118, %s119
    %p133 = scmp.eq.s32.totalorder %s22, 1
    %p134 = por %p132, %p133
    %p136 = scmp.ne.s32.totalorder %s119, %s135
    %p137 = scmp.eq.s32.totalorder %s22, 0
    %p138 = por %p136, %p137
    %s139 = ssub.s32 %s16, %s23
    %p140 = scmp.eq.s32.totalorder %s139, 0
    %s142 = sadd.s32 %s141, 1
    %s143 = scalar_select %p140, %s141, %s142
    %p146 = pneg %p140
    %p147 = scmp.eq.s32.totalorder %s16, 1
    %p148 = por %p146, %p147
    %p149 = scmp.ne.s32.totalorder %s141, %s144
    %p150 = scmp.eq.s32.totalorder %s16, 0
    %p151 = por %p149, %p150
    %p152 = scmp.ne.s32.totalorder %s141, %s144
    %p153 = scmp.eq.s32.totalorder %s21, 1
    %p154 = por %p152, %p153
    %p155 = scmp.ne.s32.totalorder %s144, %s145
    %p156 = scmp.eq.s32.totalorder %s21, 0
    %p157 = por %p155, %p156
    %p158 = scmp.ne.s32.totalorder %s144, %s145
    %p159 = scmp.eq.s32.totalorder %s22, 1
    %p160 = por %p158, %p159
    %p162 = scmp.ne.s32.totalorder %s145, %s161
    %p163 = scmp.eq.s32.totalorder %s22, 0
    %p164 = por %p162, %p163
    %s165 = ssub.s32 %s16, %s23
    %p166 = scmp.eq.s32.totalorder %s165, 0
    %s168 = sadd.s32 %s167, 1
    %s169 = scalar_select %p166, %s167, %s168
    %p172 = pneg %p166
    %p173 = scmp.eq.s32.totalorder %s16, 1
    %p174 = por %p172, %p173
    %p175 = scmp.ne.s32.totalorder %s167, %s170
    %p176 = scmp.eq.s32.totalorder %s16, 0
    %p177 = por %p175, %p176
    %p178 = scmp.ne.s32.totalorder %s167, %s170
    %p179 = scmp.eq.s32.totalorder %s21, 1
    %p180 = por %p178, %p179
    %p181 = scmp.ne.s32.totalorder %s170, %s171
    %p182 = scmp.eq.s32.totalorder %s21, 0
    %p183 = por %p181, %p182
    %p184 = scmp.ne.s32.totalorder %s170, %s171
    %p185 = scmp.eq.s32.totalorder %s22, 1
    %p186 = por %p184, %p185
    %p188 = scmp.ne.s32.totalorder %s171, %s187
    %p189 = scmp.eq.s32.totalorder %s22, 0
    %p190 = por %p188, %p189
    %s191 = ssub.s32 %s16, %s23
    %p192 = scmp.eq.s32.totalorder %s191, 0
    %s194 = sadd.s32 %s193, 1
    %s195 = scalar_select %p192, %s193, %s194
    %p198 = pneg %p192
    %p199 = scmp.eq.s32.totalorder %s16, 1
    %p200 = por %p198, %p199
    %p201 = scmp.ne.s32.totalorder %s193, %s196
    %p202 = scmp.eq.s32.totalorder %s16, 0
    %p203 = por %p201, %p202
    %p204 = scmp.ne.s32.totalorder %s193, %s196
    %p205 = scmp.eq.s32.totalorder %s21, 1
    %p206 = por %p204, %p205
    %p207 = scmp.ne.s32.totalorder %s196, %s197
    %p208 = scmp.eq.s32.totalorder %s21, 0
    %p209 = por %p207, %p208
    %p210 = scmp.ne.s32.totalorder %s196, %s197
    %p211 = scmp.eq.s32.totalorder %s22, 1
    %p212 = por %p210, %p211
    %p214 = scmp.ne.s32.totalorder %s197, %s213
    %p215 = scmp.eq.s32.totalorder %s22, 0
    %p216 = por %p214, %p215
    %s217 = ssub.s32 %s16, %s23
    %p218 = scmp.eq.s32.totalorder %s217, 0
    %s220 = sadd.s32 %s219, 1
    %s221 = scalar_select %p218, %s219, %s220
    %p224 = pneg %p218
    %p225 = scmp.eq.s32.totalorder %s16, 1
    %p226 = por %p224, %p225
    %p227 = scmp.ne.s32.totalorder %s219, %s222
    %p228 = scmp.eq.s32.totalorder %s16, 0
    %p229 = por %p227, %p228
    %p230 = scmp.ne.s32.totalorder %s219, %s222
    %p231 = scmp.eq.s32.totalorder %s21, 1
    %p232 = por %p230, %p231
    %p233 = scmp.ne.s32.totalorder %s222, %s223
    %p234 = scmp.eq.s32.totalorder %s21, 0
    %p235 = por %p233, %p234
    %p236 = scmp.ne.s32.totalorder %s222, %s223
    %p237 = scmp.eq.s32.totalorder %s22, 1
    %p238 = por %p236, %p237
    %p240 = scmp.ne.s32.totalorder %s223, %s239
    %p241 = scmp.eq.s32.totalorder %s22, 0
    %p242 = por %p240, %p241
    %s243 = ssub.s32 %s16, %s23
    %p244 = scmp.eq.s32.totalorder %s243, 0
    %s246 = sadd.s32 %s245, 1
    %s247 = scalar_select %p244, %s245, %s246
    %p250 = pneg %p244
    %p251 = scmp.eq.s32.totalorder %s16, 1
    %p252 = por %p250, %p251
    %p253 = scmp.ne.s32.totalorder %s245, %s248
    %p254 = scmp.eq.s32.totalorder %s16, 0
    %p255 = por %p253, %p254
    %p256 = scmp.ne.s32.totalorder %s245, %s248
    %p257 = scmp.eq.s32.totalorder %s21, 1
    %p258 = por %p256, %p257
    %p259 = scmp.ne.s32.totalorder %s248, %s249
    %p260 = scmp.eq.s32.totalorder %s21, 0
    %p261 = por %p259, %p260
    %p262 = scmp.ne.s32.totalorder %s248, %s249
    %p263 = scmp.eq.s32.totalorder %s22, 1
    %p264 = por %p262, %p263
    %p266 = scmp.ne.s32.totalorder %s249, %s265
    %p267 = scmp.eq.s32.totalorder %s22, 0
    %p268 = por %p266, %p267
    %s270 = sadd.s32 %s269, 1
    %p273 = scmp.eq.s32.totalorder %s16, 1
    %p274 = scmp.ne.s32.totalorder %s269, %s271
    %p275 = scmp.eq.s32.totalorder %s16, 0
    %p276 = por %p274, %p275
    %p277 = scmp.ne.s32.totalorder %s269, %s271
    %p278 = scmp.eq.s32.totalorder %s21, 1
    %p279 = por %p277, %p278
    %p280 = scmp.ne.s32.totalorder %s271, %s272
    %p281 = scmp.eq.s32.totalorder %s21, 0
    %p282 = por %p280, %p281
    %p283 = scmp.ne.s32.totalorder %s271, %s272
    %p284 = scmp.eq.s32.totalorder %s22, 1
    %p285 = por %p283, %p284
    %p287 = scmp.ne.s32.totalorder %s272, %s286
    %p288 = scmp.eq.s32.totalorder %s22, 0
    %p289 = por %p287, %p288
    %p290 = scmp.le.s32.totalorder 1, %s16
    %p291 = scmp.lt.s32.totalorder %s16, 3
    %p292 = pnand %p290, %p291
    %p293 = pneg %p292
    // Predicated region
    $region9: #{gpt_forward.2} parent=5 // pred_check
      _
    $region10: #{gpt_forward.2} parent=5 // pred_check_branch
      %295 = sbr.rel (%p292) target = $region12
    $region11: #{gpt_forward.2} parent=5 // pred_region
      %s296 = ssub.s32 %s16, 1
      // Predicated region
      $region13: #{gpt_forward.2} parent=11 // pred_check
        %p297 = pneg %p37
      $region14: #{gpt_forward.2} parent=11 // pred_check_branch
        %299 = sbr.rel (%p297) target = $region16
      $region15: #{gpt_forward.2} parent=11 // pred_region
        _
      $region16: #{gpt_forward.2} parent=11 // pred_fallthru
        _
      // Predicated region
      $region17: #{gpt_forward.2} parent=11 // pred_check
        %p300 = pneg %p58
      $region18: #{gpt_forward.2} parent=11 // pred_check_branch
        %302 = sbr.rel (%p300) target = $region20
      $region19: #{gpt_forward.2} parent=11 // pred_region
        _
      $region20: #{gpt_forward.2} parent=11 // pred_fallthru
        _
      // Predicated region
      $region21: #{gpt_forward.2} parent=11 // pred_check
        %p303 = pneg %p79
      $region22: #{gpt_forward.2} parent=11 // pred_check_branch
        %305 = sbr.rel (%p303) target = $region24
      $region23: #{gpt_forward.2} parent=11 // pred_region
        _
      $region24: #{gpt_forward.2} parent=11 // pred_fallthru
        _
    $region12: #{gpt_forward.2} parent=5 // pred_fallthru
      _
    %p306 = scmp.lt.s32.totalorder %s16, 2
    // Predicated region
    $region25: #{gpt_forward.2} parent=5 // pred_check
      %p307 = pneg %p306
    $region26: #{gpt_forward.2} parent=5 // pred_check_branch
      %309 = sbr.rel (%p307) target = $region28
    $region27: #{gpt_forward.2} parent=5 // pred_region
      // Predicated region
      $region29: #{gpt_forward.2} parent=27 // pred_check
        %p310 = pneg %p99
      $region30: #{gpt_forward.2} parent=27 // pred_check_branch
        %312 = sbr.rel (%p310) target = $region32
      $region31: #{gpt_forward.2} parent=27 // pred_region
        %p313 = scmp.lt.s32.totalorder %s16, 1
        %s314 = scalar_select %p313, %s16, 1
        %s315 = scalar_lea.vmem %s3, %s314
      $region32: #{gpt_forward.2} parent=27 // pred_fallthru
        _
      // Predicated region
      $region33: #{gpt_forward.2} parent=27 // pred_check
        %p316 = pneg %p125
      $region34: #{gpt_forward.2} parent=27 // pred_check_branch
        %318 = sbr.rel (%p316) target = $region36
      $region35: #{gpt_forward.2} parent=27 // pred_region
        %p319 = scmp.lt.s32.totalorder %s16, 1
        %s320 = scalar_select %p319, %s16, 1
        %s321 = scalar_lea.vmem %s4, %s320
      $region36: #{gpt_forward.2} parent=27 // pred_fallthru
        _
      // Predicated region
      $region37: #{gpt_forward.2} parent=27 // pred_check
        %p322 = pneg %p151
      $region38: #{gpt_forward.2} parent=27 // pred_check_branch
        %324 = sbr.rel (%p322) target = $region40
      $region39: #{gpt_forward.2} parent=27 // pred_region
        %p325 = scmp.lt.s32.totalorder %s16, 1
        %s326 = scalar_select %p325, %s16, 1
        %s327 = smul.addr %s326, 4
        %s328 = smul.addr %s327, 4
        %s329 = scalar_lea.vmem %s5, %s328
      $region40: #{gpt_forward.2} parent=27 // pred_fallthru
        _
      // Predicated region
      $region41: #{gpt_forward.2} parent=27 // pred_check
        %p330 = pneg %p177
      $region42: #{gpt_forward.2} parent=27 // pred_check_branch
        %332 = sbr.rel (%p330) target = $region44
      $region43: #{gpt_forward.2} parent=27 // pred_region
        %p333 = scmp.lt.s32.totalorder %s16, 1
        %s334 = scalar_select %p333, %s16, 1
        %s335 = smul.addr %s334, 4
        %s336 = smul.addr %s335, 4
        %s337 = scalar_lea.vmem %s6, %s336
      $region44: #{gpt_forward.2} parent=27 // pred_fallthru
        _
      // Predicated region
      $region45: #{gpt_forward.2} parent=27 // pred_check
        %p338 = pneg %p203
      $region46: #{gpt_forward.2} parent=27 // pred_check_branch
        %340 = sbr.rel (%p338) target = $region48
      $region47: #{gpt_forward.2} parent=27 // pred_region
        %p341 = scmp.lt.s32.totalorder %s16, 1
        %s342 = scalar_select %p341, %s16, 1
        %s343 = smul.addr %s342, 4
        %s344 = smul.addr %s343, 4
        %s345 = scalar_lea.vmem %s7, %s344
      $region48: #{gpt_forward.2} parent=27 // pred_fallthru
        _
      // Predicated region
      $region49: #{gpt_forward.2} parent=27 // pred_check
        %p346 = pneg %p229
      $region50: #{gpt_forward.2} parent=27 // pred_check_branch
        %348 = sbr.rel (%p346) target = $region52
      $region51: #{gpt_forward.2} parent=27 // pred_region
        %p349 = scmp.lt.s32.totalorder %s16, 1
        %s350 = scalar_select %p349, %s16, 1
        %s351 = smul.addr %s350, 4
        %s352 = smul.addr %s351, 4
        %s353 = scalar_lea.vmem %s8, %s352
      $region52: #{gpt_forward.2} parent=27 // pred_fallthru
        _
      // Predicated region
      $region53: #{gpt_forward.2} parent=27 // pred_check
        %p354 = pneg %p255
      $region54: #{gpt_forward.2} parent=27 // pred_check_branch
        %356 = sbr.rel (%p354) target = $region56
      $region55: #{gpt_forward.2} parent=27 // pred_region
        %p357 = scmp.lt.s32.totalorder %s16, 1
        %s358 = scalar_select %p357, %s16, 1
        %s359 = smul.addr %s358, 8
        %s360 = smul.addr %s359, 4
        %s361 = scalar_lea.vmem %s9, %s360
      $region56: #{gpt_forward.2} parent=27 // pred_fallthru
        _
    $region28: #{gpt_forward.2} parent=5 // pred_fallthru
      _
    %p362 = scmp.le.s32.totalorder 1, %s16
    %p363 = scmp.lt.s32.totalorder %s16, 3
    %p364 = pnand %p362, %p363
    %p365 = pneg %p364
    // Predicated region
    $region57: #{gpt_forward.2} parent=5 // pred_check
      _
    $region58: #{gpt_forward.2} parent=5 // pred_check_branch
      %367 = sbr.rel (%p364) target = $region60
    $region59: #{gpt_forward.2} parent=5 // pred_region
      %s368 = ssub.s32 %s16, 1
      %p369 = pneg %p37
      %p370 = pneg %p34
      %p371 = pneg %p58
      %p372 = pneg %p55
      %p373 = pneg %p79
      %p374 = pneg %p76
      %p375 = scmp.lt.s32.totalorder %s21, 1
      %s376 = scalar_select %p375, %s21, 1
      %s377 = scalar_lea.vmem %s3, %s376
      %p378 = pneg %p105
      %p379 = pneg %p102
      %p380 = scmp.lt.s32.totalorder %s21, 1
      %s381 = scalar_select %p380, %s21, 1
      %s382 = scalar_lea.vmem %s4, %s381
      %p383 = pneg %p131
      %p384 = pneg %p128
      %p385 = scmp.lt.s32.totalorder %s21, 1
      %s386 = scalar_select %p385, %s21, 1
      %s387 = smul.addr %s386, 4
      %s388 = smul.addr %s387, 4
      %s389 = scalar_lea.vmem %s5, %s388
      %p390 = pneg %p157
      %p391 = pneg %p154
      %p392 = scmp.lt.s32.totalorder %s21, 1
      %s393 = scalar_select %p392, %s21, 1
      %s394 = smul.addr %s393, 4
      %s395 = smul.addr %s394, 4
      %s396 = scalar_lea.vmem %s6, %s395
      %p397 = pneg %p183
      %p398 = pneg %p180
      %p399 = scmp.lt.s32.totalorder %s21, 1
      %s400 = scalar_select %p399, %s21, 1
      %s401 = smul.addr %s400, 4
      %s402 = smul.addr %s401, 4
      %s403 = scalar_lea.vmem %s7, %s402
      %p404 = pneg %p209
      %p405 = pneg %p206
      %p406 = scmp.lt.s32.totalorder %s21, 1
      %s407 = scalar_select %p406, %s21, 1
      %s408 = smul.addr %s407, 4
      %s409 = smul.addr %s408, 4
      %s410 = scalar_lea.vmem %s8, %s409
      %p411 = pneg %p235
      %p412 = pneg %p232
      %p413 = scmp.lt.s32.totalorder %s21, 1
      %s414 = scalar_select %p413, %s21, 1
      %s415 = smul.addr %s414, 8
      %s416 = smul.addr %s415, 4
      %s417 = scalar_lea.vmem %s9, %s416
      %p418 = pneg %p261
      %p419 = pneg %p258
      %p420 = pneg %p282
      %p421 = pneg %p279
      %p422 = scmp.lt.s32.totalorder %s21, 1
      %s423 = scalar_select %p422, %s21, 1
      %s424 = scalar_lea.vmem %s3, %s423
      %p425 = scmp.lt.s32.totalorder %s21, 1
      %s426 = scalar_select %p425, %s21, 1
      %s427 = scalar_lea.vmem %s4, %s426
      %p428 = scmp.lt.s32.totalorder %s21, 1
      %s429 = scalar_select %p428, %s21, 1
      %s430 = smul.addr %s429, 4
      %s431 = smul.addr %s430, 4
      %s432 = scalar_lea.vmem %s5, %s431
      %p433 = scmp.lt.s32.totalorder %s21, 1
      %s434 = scalar_select %p433, %s21, 1
      %s435 = smul.addr %s434, 4
      %s436 = smul.addr %s435, 4
      %s437 = scalar_lea.vmem %s6, %s436
      %p438 = scmp.lt.s32.totalorder %s21, 1
      %s439 = scalar_select %p438, %s21, 1
      %s440 = smul.addr %s439, 4
      %s441 = smul.addr %s440, 4
      %s442 = scalar_lea.vmem %s7, %s441
      %p443 = scmp.lt.s32.totalorder %s21, 1
      %s444 = scalar_select %p443, %s21, 1
      %s445 = smul.addr %s444, 4
      %s446 = smul.addr %s445, 4
      %s447 = scalar_lea.vmem %s8, %s446
      %p448 = scmp.lt.s32.totalorder %s21, 1
      %s449 = scalar_select %p448, %s21, 1
      %s450 = smul.addr %s449, 8
      %s451 = smul.addr %s450, 4
      %s452 = scalar_lea.vmem %s9, %s451
      %p454 = scmp.eq.s32.totalorder %s21, 0
      // Predicated region
      $region61: #{gpt_forward.2} parent=59 // pred_check
        %p455 = pneg %p454
      $region62: #{gpt_forward.2} parent=59 // pred_check_branch
        %457 = sbr.rel (%p455) target = $region64
      $region63: #{gpt_forward.2} parent=59 // pred_region
        %v458 = vld [vmem:[%s0] sm:$0xff]
        %v459 = vld [vmem:[%s0 + $0x8] sm:$0xff]
        %vm460 = vcmask 261120
        %461 = vst.msk [vmem:[%s10] sm:$0xff] %vm460, %v458
        %462 = vst.msk [vmem:[%s10 + $0x8] sm:$0xff] %vm460, %v459
      $region64: #{gpt_forward.2} parent=59 // pred_fallthru
        _
      %v463 = vld [vmem:[%s10] sm:$0xff]
      %v464 = vld [vmem:[%s10 + $0x8] sm:$0xff]
      %v465 = vlaneseq
      %v466 = vshrl.u32 %v465, 7
      %v467 = vlaneseq
      %v468 = vand.u32 %v467, 127
      %vm469 = vcmp.le.s32.totalorder %v468, %v466
      %v470 = vmul.f32 %v463, %v463
      %v471 = vmul.f32 %v464, %v464
      %vm472 = vcmask 261120
      %v473 = vsel %vm472, %v470, 0.0
      %474 = vadd.xlane.f32.xlu0 %v473
      %v475 = vpop.xlane.xlu0 %474
      %v476 = vsel %vm472, %v471, 0.0
      %477 = vadd.xlane.f32.xlu0 %v476
      %v478 = vpop.xlane.xlu0 %477
      %v479 = vrcp.pop 32.0
      %v480 = vmul.f32 32.0, %v479
      %v481 = vsub.f32 1.0, %v480
      %v482 = vmul.f32 %v479, %v481
      %v483 = vadd.f32 %v479, %v482
      %vm484 = vweird.f32 %v479
      %v485 = vsel %vm484, %v479, %v483
      %v486 = vmul.f32 %v475, %v485
      %v487 = vmul.f32 %v478, %v485
      %v488 = vadd.f32 %v486, 1e-05
      %v489 = vadd.f32 %v487, 1e-05
      %v490 = vrsqrt.pop %v488
      %v491 = vmul.f32 %v490, %v488
      %v492 = vmul.f32 %v491, %v490
      %v493 = vmul.f32 0.5, %v492
      %v494 = vsub.f32 1.5, %v493
      %v495 = vmul.f32 %v490, %v494
      %vm496 = vweird.f32 %v488
      %vm497 = vweird.f32 %v490
      %vm498 = vmor %vm496, %vm497
      %v499 = vsel %vm498, %v490, %v495
      %v500 = vrsqrt.pop %v489
      %v501 = vmul.f32 %v500, %v489
      %v502 = vmul.f32 %v501, %v500
      %v503 = vmul.f32 0.5, %v502
      %v504 = vsub.f32 1.5, %v503
      %v505 = vmul.f32 %v500, %v504
      %vm506 = vweird.f32 %v489
      %vm507 = vweird.f32 %v500
      %vm508 = vmor %vm506, %vm507
      %v509 = vsel %vm508, %v500, %v505
      %v510 = vmul.f32 %v463, %v499
      %v511 = vmul.f32 %v464, %v509
      %v512 = vld [vmem:[%s424] sm:$0x1]
      %v514 = vperm.slane %v512, 0
      %v516 = vmul.f32 %v510, %v514
      %v517 = vmul.f32 %v511, %v514
      %v518 = vpack.c.bf16 %v517, %v516
      %v519 = vld [vmem:[%s432] sm:$0xf]
      %v520 = vld [vmem:[%s432 + $0x4] sm:$0xf]
      %v521 = vld [vmem:[%s432 + $0x8] sm:$0xf]
      %v522 = vld [vmem:[%s432 + $0xc] sm:$0xf]
      %v527 = vunpack.c.l.b16 %v519
      %v528 = vunpack.c.l.b16 %v520
      %v529 = vunpack.c.l.b16 %v521
      %v530 = vunpack.c.l.b16 %v522
      %v531 = vpack.c.b16 %v528, %v527
      %v532 = vpack.c.b16 %v530, %v529
      %v536 = vsel %vm472, %v518, 0
      %538 = vmatpush.bf16.msra.mxu0 0
      %539 = vmatpush.bf16.msra.mxu0 0
      %540 = vmatpush.bf16.msra.mxu0 0
      %541 = vmatpush.bf16.msra.mxu0 0
      %542 = vmatpush.bf16.msra.mxu0 0
      %543 = vmatpush.bf16.msra.mxu0 0
      %544 = vmatpush.bf16.msra.mxu0 %v532
      %545 = vmatpush.bf16.msra.mxu0 %v531
      %546 = vmatmul.bf16.gmra.mxu0 %v536
      %v547 = vpop.f32.mrf.mxu0
      %v548 = vadd.f32 0.0, %v547
      %v549 = vpop.f32.mrf.mxu0
      %v550 = vadd.f32 0.0, %v549
      %551 = vdwg.mxu0
      %v552 = vld [vmem:[%s437] sm:$0xf]
      %v553 = vld [vmem:[%s437 + $0x4] sm:$0xf]
      %v554 = vld [vmem:[%s437 + $0x8] sm:$0xf]
      %v555 = vld [vmem:[%s437 + $0xc] sm:$0xf]
      %v560 = vunpack.c.l.b16 %v552
      %v561 = vunpack.c.l.b16 %v553
      %v562 = vunpack.c.l.b16 %v554
      %v563 = vunpack.c.l.b16 %v555
      %v564 = vpack.c.b16 %v561, %v560
      %v565 = vpack.c.b16 %v563, %v562
      %568 = vmatpush.bf16.msra.mxu0 0
      %569 = vmatpush.bf16.msra.mxu0 0
      %570 = vmatpush.bf16.msra.mxu0 0
      %571 = vmatpush.bf16.msra.mxu0 0
      %572 = vmatpush.bf16.msra.mxu0 0
      %573 = vmatpush.bf16.msra.mxu0 0
      %574 = vmatpush.bf16.msra.mxu0 %v565
      %575 = vmatpush.bf16.msra.mxu0 %v564
      %576 = vmatmul.bf16.gmra.mxu0 %v536
      %v577 = vpop.f32.mrf.mxu0
      %v578 = vadd.f32 0.0, %v577
      %v579 = vpop.f32.mrf.mxu0
      %v580 = vadd.f32 0.0, %v579
      %581 = vdwg.mxu0
      %v582 = vld [vmem:[%s1] sm:$0xff]
      %v583 = vld [vmem:[%s1 + $0x8] sm:$0xff]
      %v584 = vmul.f32 %v548, %v582
      %v585 = vmul.f32 %v550, %v583
      %v586 = vld [vmem:[%s2] sm:$0xff]
      %v587 = vld [vmem:[%s2 + $0x8] sm:$0xff]
      %v588 = vmul.f32 %v578, %v586
      %v589 = vmul.f32 %v580, %v587
      %v590 = vadd.f32 %v584, %v588
      %v591 = vadd.f32 %v585, %v589
      %v592 = vpack.c.bf16 %v590, %v590
      %594 = vrot.lane.b32.xlu0 %v592, 96
      %v595 = vpop.permute.xlu0 %594
      %vm596 = vcmask 130048
      %v598 = vsel %vm596, %v592, 0
      %v601 = vsel %vm596, %v595, 0
      %603 = vmatpush.bf16.xpose.msra.mxu0 0
      %604 = vmatpush.bf16.xpose.msra.mxu0 0
      %605 = vmatpush.bf16.xpose.msra.mxu0 0
      %606 = vmatpush.bf16.xpose.msra.mxu0 0
      %607 = vmatpush.bf16.xpose.msra.mxu0 0
      %608 = vmatpush.bf16.xpose.msra.mxu0 0
      %609 = vmatpush.bf16.xpose.msra.mxu0 0
      %610 = vmatpush.bf16.xpose.msra.mxu0 %v601
      %611 = vmatmul.bf16.gmra.mxu0 %v598
      %v612 = vpop.f32.mrf.mxu0
      %v613 = vadd.f32 0.0, %v612
      %v614 = vpop.f32.mrf.mxu0
      %615 = vdwg.mxu0
      %v616 = vsel %vm469, %v613, -inf
      %vm617 = vcmask 64512
      %v618 = vsel %vm617, %v616, -inf
      %619 = vmax.xlane.f32.xlu0 %v618
      %v620 = vpop.xlane.xlu0 %619
      %v621 = vsub.f32 %v616, %v620
      %v622 = vmul.f32 %v621, 1.442695
      %v623 = vpow.pop %v622
      %v624 = vsel %vm617, %v623, 0.0
      %625 = vadd.xlane.f32.xlu0 %v624
      %v626 = vpop.xlane.xlu0 %625
      %v627 = vpack.c.bf16 %v623, %v623
      %628 = vrot.lane.b32.xlu0 %v592, 64
      %v629 = vpop.permute.xlu0 %628
      %v631 = vsel %vm617, %v627, 0
      %vm633 = vcmask 1043456
      %v635 = vsel %vm633, %v629, 0
      %637 = vmatpush.bf16.msra.mxu0 0
      %638 = vmatpush.bf16.msra.mxu0 0
      %639 = vmatpush.bf16.msra.mxu0 0
      %640 = vmatpush.bf16.msra.mxu0 0
      %641 = vmatpush.bf16.msra.mxu0 0
      %642 = vmatpush.bf16.msra.mxu0 0
      %643 = vmatpush.bf16.msra.mxu0 0
      %644 = vmatpush.bf16.msra.mxu0 %v635
      %645 = vmatmul.bf16.gmra.mxu0 %v631
      %v646 = vpop.f32.mrf.mxu0
      %v647 = vadd.f32 0.0, %v646
      %v648 = vpop.f32.mrf.mxu0
      %649 = vdwg.mxu0
      %v650 = vrcp.pop %v626
      %v651 = vmul.f32 %v647, %v650
      %652 = vrot.lane.b32.xlu0 %v592, 112
      %v653 = vpop.permute.xlu0 %652
      %654 = vrot.lane.b32.xlu0 %v592, 80
      %v655 = vpop.permute.xlu0 %654
      %v657 = vsel %vm596, %v653, 0
      %v660 = vsel %vm596, %v655, 0
      %662 = vmatpush.bf16.xpose.msra.mxu0 0
      %663 = vmatpush.bf16.xpose.msra.mxu0 0
      %664 = vmatpush.bf16.xpose.msra.mxu0 0
      %665 = vmatpush.bf16.xpose.msra.mxu0 0
      %666 = vmatpush.bf16.xpose.msra.mxu0 0
      %667 = vmatpush.bf16.xpose.msra.mxu0 0
      %668 = vmatpush.bf16.xpose.msra.mxu0 0
      %669 = vmatpush.bf16.xpose.msra.mxu0 %v660
      %670 = vmatmul.bf16.gmra.mxu0 %v657
      %v671 = vpop.f32.mrf.mxu0
      %v672 = vadd.f32 0.0, %v671
      %v673 = vpop.f32.mrf.mxu0
      %674 = vdwg.mxu0
      %v675 = vsel %vm469, %v672, -inf
      %v676 = vsel %vm617, %v675, -inf
      %677 = vmax.xlane.f32.xlu0 %v676
      %v678 = vpop.xlane.xlu0 %677
      %v679 = vsub.f32 %v675, %v678
      %v680 = vmul.f32 %v679, 1.442695
      %v681 = vpow.pop %v680
      %v682 = vsel %vm617, %v681, 0.0
      %683 = vadd.xlane.f32.xlu0 %v682
      %v684 = vpop.xlane.xlu0 %683
      %v685 = vpack.c.bf16 %v681, %v681
      %686 = vrot.lane.b32.xlu0 %v592, 48
      %v687 = vpop.permute.xlu0 %686
      %v689 = vsel %vm617, %v685, 0
      %v692 = vsel %vm633, %v687, 0
      %694 = vmatpush.bf16.msra.mxu0 0
      %695 = vmatpush.bf16.msra.mxu0 0
      %696 = vmatpush.bf16.msra.mxu0 0
      %697 = vmatpush.bf16.msra.mxu0 0
      %698 = vmatpush.bf16.msra.mxu0 0
      %699 = vmatpush.bf16.msra.mxu0 0
      %700 = vmatpush.bf16.msra.mxu0 0
      %701 = vmatpush.bf16.msra.mxu0 %v692
      %702 = vmatmul.bf16.gmra.mxu0 %v689
      %v703 = vpop.f32.mrf.mxu0
      %v704 = vadd.f32 0.0, %v703
      %v705 = vpop.f32.mrf.mxu0
      %706 = vdwg.mxu0
      %v707 = vrcp.pop %v684
      %v708 = vmul.f32 %v704, %v707
      %710 = vrot.lane.b32.xlu0 %v708, 16
      %v711 = vpop.permute.xlu0 %710
      %v713 = vsel %vm596, %v651, %v711
      %v714 = vpack.c.bf16 %v591, %v591
      %716 = vrot.lane.b32.xlu0 %v714, 96
      %v717 = vpop.permute.xlu0 %716
      %v719 = vsel %vm596, %v714, 0
      %v722 = vsel %vm596, %v717, 0
      %724 = vmatpush.bf16.xpose.msra.mxu0 0
      %725 = vmatpush.bf16.xpose.msra.mxu0 0
      %726 = vmatpush.bf16.xpose.msra.mxu0 0
      %727 = vmatpush.bf16.xpose.msra.mxu0 0
      %728 = vmatpush.bf16.xpose.msra.mxu0 0
      %729 = vmatpush.bf16.xpose.msra.mxu0 0
      %730 = vmatpush.bf16.xpose.msra.mxu0 0
      %731 = vmatpush.bf16.xpose.msra.mxu0 %v722
      %732 = vmatmul.bf16.gmra.mxu0 %v719
      %v733 = vpop.f32.mrf.mxu0
      %v734 = vadd.f32 0.0, %v733
      %v735 = vpop.f32.mrf.mxu0
      %736 = vdwg.mxu0
      %v737 = vsel %vm469, %v734, -inf
      %v738 = vsel %vm617, %v737, -inf
      %739 = vmax.xlane.f32.xlu0 %v738
      %v740 = vpop.xlane.xlu0 %739
      %v741 = vsub.f32 %v737, %v740
      %v742 = vmul.f32 %v741, 1.442695
      %v743 = vpow.pop %v742
      %v744 = vsel %vm617, %v743, 0.0
      %745 = vadd.xlane.f32.xlu0 %v744
      %v746 = vpop.xlane.xlu0 %745
      %v747 = vpack.c.bf16 %v743, %v743
      %748 = vrot.lane.b32.xlu0 %v714, 64
      %v749 = vpop.permute.xlu0 %748
      %v751 = vsel %vm617, %v747, 0
      %v754 = vsel %vm633, %v749, 0
      %756 = vmatpush.bf16.msra.mxu0 0
      %757 = vmatpush.bf16.msra.mxu0 0
      %758 = vmatpush.bf16.msra.mxu0 0
      %759 = vmatpush.bf16.msra.mxu0 0
      %760 = vmatpush.bf16.msra.mxu0 0
      %761 = vmatpush.bf16.msra.mxu0 0
      %762 = vmatpush.bf16.msra.mxu0 0
      %763 = vmatpush.bf16.msra.mxu0 %v754
      %764 = vmatmul.bf16.gmra.mxu0 %v751
      %v765 = vpop.f32.mrf.mxu0
      %v766 = vadd.f32 0.0, %v765
      %v767 = vpop.f32.mrf.mxu0
      %768 = vdwg.mxu0
      %v769 = vrcp.pop %v746
      %v770 = vmul.f32 %v766, %v769
      %771 = vrot.lane.b32.xlu0 %v714, 112
      %v772 = vpop.permute.xlu0 %771
      %773 = vrot.lane.b32.xlu0 %v714, 80
      %v774 = vpop.permute.xlu0 %773
      %v776 = vsel %vm596, %v772, 0
      %v779 = vsel %vm596, %v774, 0
      %781 = vmatpush.bf16.xpose.msra.mxu0 0
      %782 = vmatpush.bf16.xpose.msra.mxu0 0
      %783 = vmatpush.bf16.xpose.msra.mxu0 0
      %784 = vmatpush.bf16.xpose.msra.mxu0 0
      %785 = vmatpush.bf16.xpose.msra.mxu0 0
      %786 = vmatpush.bf16.xpose.msra.mxu0 0
      %787 = vmatpush.bf16.xpose.msra.mxu0 0
      %788 = vmatpush.bf16.xpose.msra.mxu0 %v779
      %789 = vmatmul.bf16.gmra.mxu0 %v776
      %v790 = vpop.f32.mrf.mxu0
      %v791 = vadd.f32 0.0, %v790
      %v792 = vpop.f32.mrf.mxu0
      %793 = vdwg.mxu0
      %v794 = vsel %vm469, %v791, -inf
      %v795 = vsel %vm617, %v794, -inf
      %796 = vmax.xlane.f32.xlu0 %v795
      %v797 = vpop.xlane.xlu0 %796
      %v798 = vsub.f32 %v794, %v797
      %v799 = vmul.f32 %v798, 1.442695
      %v800 = vpow.pop %v799
      %v801 = vsel %vm617, %v800, 0.0
      %802 = vadd.xlane.f32.xlu0 %v801
      %v803 = vpop.xlane.xlu0 %802
      %v804 = vpack.c.bf16 %v800, %v800
      %805 = vrot.lane.b32.xlu0 %v714, 48
      %v806 = vpop.permute.xlu0 %805
      %v808 = vsel %vm617, %v804, 0
      %v811 = vsel %vm633, %v806, 0
      %813 = vmatpush.bf16.msra.mxu0 0
      %814 = vmatpush.bf16.msra.mxu0 0
      %815 = vmatpush.bf16.msra.mxu0 0
      %816 = vmatpush.bf16.msra.mxu0 0
      %817 = vmatpush.bf16.msra.mxu0 0
      %818 = vmatpush.bf16.msra.mxu0 0
      %819 = vmatpush.bf16.msra.mxu0 0
      %820 = vmatpush.bf16.msra.mxu0 %v811
      %821 = vmatmul.bf16.gmra.mxu0 %v808
      %v822 = vpop.f32.mrf.mxu0
      %v823 = vadd.f32 0.0, %v822
      %v824 = vpop.f32.mrf.mxu0
      %825 = vdwg.mxu0
      %v826 = vrcp.pop %v803
      %v827 = vmul.f32 %v823, %v826
      %829 = vrot.lane.b32.xlu0 %v827, 16
      %v830 = vpop.permute.xlu0 %829
      %v832 = vsel %vm596, %v770, %v830
      %v833 = vpack.c.bf16 %v832, %v713
      %v834 = vld [vmem:[%s442] sm:$0xf]
      %v835 = vld [vmem:[%s442 + $0x4] sm:$0xf]
      %v836 = vld [vmem:[%s442 + $0x8] sm:$0xf]
      %v837 = vld [vmem:[%s442 + $0xc] sm:$0xf]
      %v842 = vunpack.c.l.b16 %v834
      %v843 = vunpack.c.l.b16 %v835
      %v844 = vunpack.c.l.b16 %v836
      %v845 = vunpack.c.l.b16 %v837
      %v846 = vpack.c.b16 %v843, %v842
      %v847 = vpack.c.b16 %v845, %v844
      %v851 = vsel %vm472, %v833, 0
      %853 = vmatpush.bf16.msra.mxu0 0
      %854 = vmatpush.bf16.msra.mxu0 0
      %855 = vmatpush.bf16.msra.mxu0 0
      %856 = vmatpush.bf16.msra.mxu0 0
      %857 = vmatpush.bf16.msra.mxu0 0
      %858 = vmatpush.bf16.msra.mxu0 0
      %859 = vmatpush.bf16.msra.mxu0 %v847
      %860 = vmatpush.bf16.msra.mxu0 %v846
      %861 = vmatmul.bf16.gmra.mxu0 %v851
      %v862 = vpop.f32.mrf.mxu0
      %v863 = vadd.f32 0.0, %v862
      %v864 = vpop.f32.mrf.mxu0
      %v865 = vadd.f32 0.0, %v864
      %866 = vdwg.mxu0
      %v867 = vadd.f32 %v463, %v863
      %v868 = vadd.f32 %v464, %v865
      %v869 = vmul.f32 %v867, %v867
      %v870 = vmul.f32 %v868, %v868
      %v871 = vsel %vm472, %v869, 0.0
      %872 = vadd.xlane.f32.xlu0 %v871
      %v873 = vpop.xlane.xlu0 %872
      %v874 = vsel %vm472, %v870, 0.0
      %875 = vadd.xlane.f32.xlu0 %v874
      %v876 = vpop.xlane.xlu0 %875
      %v877 = vmul.f32 %v873, %v485
      %v878 = vmul.f32 %v876, %v485
      %v879 = vadd.f32 %v877, 1e-05
      %v880 = vadd.f32 %v878, 1e-05
      %v881 = vrsqrt.pop %v879
      %v882 = vmul.f32 %v881, %v879
      %v883 = vmul.f32 %v882, %v881
      %v884 = vmul.f32 0.5, %v883
      %v885 = vsub.f32 1.5, %v884
      %v886 = vmul.f32 %v881, %v885
      %vm887 = vweird.f32 %v879
      %vm888 = vweird.f32 %v881
      %vm889 = vmor %vm887, %vm888
      %v890 = vsel %vm889, %v881, %v886
      %v891 = vrsqrt.pop %v880
      %v892 = vmul.f32 %v891, %v880
      %v893 = vmul.f32 %v892, %v891
      %v894 = vmul.f32 0.5, %v893
      %v895 = vsub.f32 1.5, %v894
      %v896 = vmul.f32 %v891, %v895
      %vm897 = vweird.f32 %v880
      %vm898 = vweird.f32 %v891
      %vm899 = vmor %vm897, %vm898
      %v900 = vsel %vm899, %v891, %v896
      %v901 = vmul.f32 %v867, %v890
      %v902 = vmul.f32 %v868, %v900
      %v903 = vld [vmem:[%s427] sm:$0x1]
      %v905 = vperm.slane %v903, 0
      %v907 = vmul.f32 %v901, %v905
      %v908 = vmul.f32 %v902, %v905
      %v909 = vpack.c.bf16 %v908, %v907
      %v910 = vld [vmem:[%s447] sm:$0xf]
      %v911 = vld [vmem:[%s447 + $0x4] sm:$0xf]
      %v912 = vld [vmem:[%s447 + $0x8] sm:$0xf]
      %v913 = vld [vmem:[%s447 + $0xc] sm:$0xf]
      %v918 = vunpack.c.l.b16 %v910
      %v919 = vunpack.c.l.b16 %v911
      %v920 = vunpack.c.l.b16 %v912
      %v921 = vunpack.c.l.b16 %v913
      %v922 = vpack.c.b16 %v919, %v918
      %v923 = vpack.c.b16 %v921, %v920
      %v927 = vsel %vm472, %v909, 0
      %929 = vmatpush.bf16.msra.mxu0 0
      %930 = vmatpush.bf16.msra.mxu0 0
      %931 = vmatpush.bf16.msra.mxu0 0
      %932 = vmatpush.bf16.msra.mxu0 0
      %933 = vmatpush.bf16.msra.mxu0 0
      %934 = vmatpush.bf16.msra.mxu0 0
      %935 = vmatpush.bf16.msra.mxu0 %v923
      %936 = vmatpush.bf16.msra.mxu0 %v922
      %937 = vmatmul.bf16.gmra.mxu0 %v927
      %v938 = vpop.f32.mrf.mxu0
      %v939 = vadd.f32 0.0, %v938
      %v940 = vpop.f32.mrf.mxu0
      %v941 = vadd.f32 0.0, %v940
      %942 = vdwg.mxu0
      %v943 = vxor.u32 %v939, 2147483648
      %v944 = vxor.u32 %v941, 2147483648
      %v945 = vmul.f32 %v943, 1.442695
      %v946 = vpow.pop %v945
      %v947 = vmul.f32 %v944, 1.442695
      %v948 = vpow.pop %v947
      %v949 = vadd.f32 %v946, 1.0
      %v950 = vadd.f32 %v948, 1.0
      %v951 = vrcp.pop %v949
      %v952 = vmul.f32 %v949, %v951
      %v953 = vsub.f32 1.0, %v952
      %v954 = vmul.f32 %v951, %v953
      %v955 = vadd.f32 %v951, %v954
      %vm956 = vweird.f32 %v949
      %vm957 = vweird.f32 %v951
      %vm958 = vmor %vm956, %vm957
      %v959 = vsel %vm958, %v951, %v955
      %v960 = vand.u32 2147483647, %v949
      %vm961 = vcmp.eq.f32.partialorder %v960, 8.507059e+37
      %v962 = vand.u32 %v949, 2147483648
      %v963 = vor.u32 1.1754944e-38, %v962
      %v964 = vsel %vm961, %v963, %v959
      %v965 = vmul.f32 1.0, %v964
      %v966 = vrcp.pop %v950
      %v967 = vmul.f32 %v950, %v966
      %v968 = vsub.f32 1.0, %v967
      %v969 = vmul.f32 %v966, %v968
      %v970 = vadd.f32 %v966, %v969
      %vm971 = vweird.f32 %v950
      %vm972 = vweird.f32 %v966
      %vm973 = vmor %vm971, %vm972
      %v974 = vsel %vm973, %v966, %v970
      %v975 = vand.u32 2147483647, %v950
      %vm976 = vcmp.eq.f32.partialorder %v975, 8.507059e+37
      %v977 = vand.u32 %v950, 2147483648
      %v978 = vor.u32 1.1754944e-38, %v977
      %v979 = vsel %vm976, %v978, %v974
      %v980 = vmul.f32 1.0, %v979
      %v981 = vmul.f32 %v939, %v965
      %v982 = vmul.f32 %v941, %v980
      %985 = vrot.lane.b32.xlu0 %v939, 64
      %v986 = vpop.permute.xlu0 %985
      %987 = vrot.lane.b32.xlu0 %v941, 64
      %v988 = vpop.permute.xlu0 %987
      %v991 = vmul.f32 %v981, %v986
      %v992 = vmul.f32 %v982, %v988
      %v993 = vpack.c.bf16 %v992, %v991
      %v994 = vld [vmem:[%s452] sm:$0xf]
      %v995 = vld [vmem:[%s452 + $0x4] sm:$0xf]
      %v996 = vld [vmem:[%s452 + $0x8] sm:$0xf]
      %v997 = vld [vmem:[%s452 + $0xc] sm:$0xf]
      %v998 = vld [vmem:[%s452 + $0x10] sm:$0xf]
      %v999 = vld [vmem:[%s452 + $0x14] sm:$0xf]
      %v1000 = vld [vmem:[%s452 + $0x18] sm:$0xf]
      %v1001 = vld [vmem:[%s452 + $0x1c] sm:$0xf]
      %v1010 = vunpack.c.l.b16 %v994
      %v1011 = vunpack.c.l.b16 %v995
      %v1012 = vunpack.c.l.b16 %v996
      %v1013 = vunpack.c.l.b16 %v997
      %v1014 = vunpack.c.l.b16 %v998
      %v1015 = vunpack.c.l.b16 %v999
      %v1016 = vunpack.c.l.b16 %v1000
      %v1017 = vunpack.c.l.b16 %v1001
      %v1018 = vpack.c.b16 %v1011, %v1010
      %v1019 = vpack.c.b16 %v1013, %v1012
      %v1020 = vpack.c.b16 %v1015, %v1014
      %v1021 = vpack.c.b16 %v1017, %v1016
      %vm1026 = vcmask 523264
      %v1028 = vsel %vm1026, %v993, 0
      %1030 = vmatpush.bf16.msra.mxu0 0
      %1031 = vmatpush.bf16.msra.mxu0 0
      %1032 = vmatpush.bf16.msra.mxu0 0
      %1033 = vmatpush.bf16.msra.mxu0 0
      %1034 = vmatpush.bf16.msra.mxu0 %v1021
      %1035 = vmatpush.bf16.msra.mxu0 %v1020
      %1036 = vmatpush.bf16.msra.mxu0 %v1019
      %1037 = vmatpush.bf16.msra.mxu0 %v1018
      %1038 = vmatmul.bf16.gmra.mxu0 %v1028
      %v1039 = vpop.f32.mrf.mxu0
      %v1040 = vadd.f32 0.0, %v1039
      %v1041 = vpop.f32.mrf.mxu0
      %v1042 = vadd.f32 0.0, %v1041
      %1043 = vdwg.mxu0
      %v1044 = vadd.f32 %v867, %v1040
      %v1045 = vadd.f32 %v868, %v1042
      %1046 = vst.msk [vmem:[%s10] sm:$0xff] %vm472, %v1044
      %1047 = vst.msk [vmem:[%s10 + $0x8] sm:$0xff] %vm472, %v1045
      // Predicated region
      $region65: #{gpt_forward.2} parent=59 // pred_check
        %p1048 = pneg %p279
      $region66: #{gpt_forward.2} parent=59 // pred_check_branch
        %1050 = sbr.rel (%p1048) target = $region68
      $region67: #{gpt_forward.2} parent=59 // pred_region
        _
      $region68: #{gpt_forward.2} parent=59 // pred_fallthru
        _
      // Predicated region
      $region69: #{gpt_forward.2} parent=59 // pred_check
        %p1051 = pneg %p279
      $region70: #{gpt_forward.2} parent=59 // pred_check_branch
        %1053 = sbr.rel (%p1051) target = $region72
      $region71: #{gpt_forward.2} parent=59 // pred_region
        _
      $region72: #{gpt_forward.2} parent=59 // pred_fallthru
        _
    $region60: #{gpt_forward.2} parent=5 // pred_fallthru
      _
    %p1054 = scmp.le.s32.totalorder 2, %s16
    // Predicated region
    $region73: #{gpt_forward.2} parent=5 // pred_check
      %p1055 = pneg %p1054
    $region74: #{gpt_forward.2} parent=5 // pred_check_branch
      %1057 = sbr.rel (%p1055) target = $region76
    $region75: #{gpt_forward.2} parent=5 // pred_region
      %s1058 = ssub.s32 %s16, 2
    $region76: #{gpt_forward.2} parent=5 // pred_fallthru
      _
  $region6: #{gpt_forward.2} parent=0 // loop_footer
    %s20 = sadd.s32 1, %s16
  $region7: #{gpt_forward.2} parent=0 // loop_footer_branch
    %15 = sbr.rel target = $region3
  $region8: #{gpt_forward.2} parent=0 // loop_exit
    _

</llo_original>
